<compile_context>
chip_gen: v7x
topology: tpu7x:2x2x1
jax: 0.10.0
libtpu: 0.0.40
codegen_flags: <defaults>
</compile_context>

<pallas_src>
import jax
import jax.numpy as jnp
from jax.experimental import pallas as pl
from jax.experimental.pallas import tpu as pltpu

# ---- problem sizes (matching Inception-v3's tail dims, small batch) ---------
N = 2            # batch
C_FEAT = 2048    # inception.fc.in_features
H = W = 8        # Mixed_7c spatial size
HW = H * W
EMBED = 32       # embed_size
P_DROP = 0.5     # NOTE: threshold trick requires 0 < P_DROP < 1

_KEEP_THRESHOLD = int((1.0 - P_DROP) * (2 ** 32))   # keep iff bits < threshold
_DROP_SCALE = 1.0 / (1.0 - P_DROP)


def encoder_head_kernel(x_ref, w_ref, b_ref, rnd_ref, out_ref):
    """x_ref:   VMEM (N*HW, C) bf16  backbone feature map, lane-dense (C on lanes)
       w_ref:   VMEM (C, E)    bf16  fc weight transposed, 1/HW pre-folded
       b_ref:   VMEM (1, E)    f32   fc bias
       rnd_ref: VMEM (N, E)    u32   pre-drawn dropout random bits
       out_ref: VMEM (N, E)    f32
    """
    n, e = out_ref.shape
    hw = x_ref.shape[0] // n

    # 1) fused avg-pool + fc: MXU matmul with f32 accumulation, then a small
    #    sublane sum over the HW rows belonging to each batch element.
    y = jnp.dot(x_ref[...], w_ref[...],
                preferred_element_type=jnp.float32)          # (N*HW, E) f32
    pooled = jnp.sum(y.reshape(n, hw, e), axis=1)            # (N, E) f32

    # 2) bias + ReLU
    feat = jnp.maximum(pooled + b_ref[...], 0.0)

    # 3) Dropout(p=0.5), training semantics: keep iff bits < (1-p)*2^32
    keep = rnd_ref[...] < jnp.asarray(_KEEP_THRESHOLD, dtype=jnp.uint32)
    out_ref[...] = jnp.where(keep, feat * _DROP_SCALE, 0.0)


def encoder_cnn_head(feature_map_nhwc, w_fc, b_fc, dropout_key):
    """feature_map_nhwc: (N, H, W, C) bf16 -- stand-in for the Inception backbone
       output in its native TPU layout (the pretrained backbone itself is
       untranslatable).
       w_fc: (E, C) PyTorch Linear weight layout; b_fc: (E,).
       dropout_key: jax PRNG key for the dropout mask."""
    n, h, w, c = feature_map_nhwc.shape
    hw = h * w
    e = w_fc.shape[0]

    # Free reshape: (N, H, W, C) -> (N*HW, C), C stays on lanes (lane-dense).
    x2d = feature_map_nhwc.reshape(n * hw, c).astype(jnp.bfloat16)

    # fc weight as (C, E) bf16 with the 1/HW mean-scale folded in (exact: 1/64
    # is a power of two).  One-time prep, tiny tensor.
    w_ce = (jnp.transpose(w_fc, (1, 0)) * (1.0 / hw)).astype(jnp.bfloat16)
    b_2d = b_fc.reshape(1, -1).astype(jnp.float32)

    # Tiny (N, E) dropout bits drawn host-side; kernel does the threshold compare.
    rbits = jax.random.bits(dropout_key, (n, e), dtype=jnp.uint32)

    bytes_accessed = (x2d.size * 2 + w_ce.size * 2 + b_2d.size * 4
                      + rbits.size * 4 + n * e * 4)
    return pl.pallas_call(
        encoder_head_kernel,
        out_shape=jax.ShapeDtypeStruct((n, e), jnp.float32),
        in_specs=[
            pl.BlockSpec(memory_space=pltpu.MemorySpace.VMEM),   # x2d
            pl.BlockSpec(memory_space=pltpu.MemorySpace.VMEM),   # w_ce
            pl.BlockSpec(memory_space=pltpu.MemorySpace.VMEM),   # bias
            pl.BlockSpec(memory_space=pltpu.MemorySpace.VMEM),   # rbits
        ],
        out_specs=pl.BlockSpec(memory_space=pltpu.MemorySpace.VMEM),
        cost_estimate=pl.CostEstimate(
            flops=2 * n * hw * c * e,
            transcendentals=0,
            bytes_accessed=bytes_accessed),
    )(x2d, w_ce, b_2d, rbits)


if __name__ == "__main__":
    key = jax.random.PRNGKey(0)
    k_img, k_feat, k_w, k_b, k_drop = jax.random.split(key, 5)

    # Module-level input (interface completeness only): small NCHW image batch.
    images = jax.random.normal(k_img, (N, 3, 32, 32), dtype=jnp.float32)

    # TODO(synk): pretrained Inception-v3 backbone not reproduced; synthesize its
    # output feature map (N, 8, 8, 2048) deterministically in the backbone's
    # native TPU (NHWC) layout, already bf16.
    feat_map = jax.random.normal(k_feat, (N, H, W, C_FEAT), dtype=jnp.bfloat16)

    # Deterministic fc params (nn.Linear(2048, embed_size) shapes, PyTorch layout).
    w_fc = jax.random.normal(k_w, (EMBED, C_FEAT), dtype=jnp.float32) * 0.02
    b_fc = jax.random.normal(k_b, (EMBED,), dtype=jnp.float32) * 0.02

    out = encoder_cnn_head(feat_map, w_fc, b_fc, dropout_key=k_drop)
    out = jax.block_until_ready(out)
    assert out.shape == (N, EMBED)

    # Pure-JAX reference mirroring the kernel's math exactly (bf16 matmul inputs,
    # f32 accumulation, matmul-then-pool, same dropout bits / threshold).
    x2d_ref = feat_map.reshape(N * HW, C_FEAT)
    w_ce_ref = (jnp.transpose(w_fc, (1, 0)) * (1.0 / HW)).astype(jnp.bfloat16)
    y_ref = jnp.dot(x2d_ref, w_ce_ref, preferred_element_type=jnp.float32)
    pooled_ref = y_ref.reshape(N, HW, EMBED).sum(axis=1)
    relu_ref = jnp.maximum(pooled_ref + b_fc, 0.0)
    rbits_ref = jax.random.bits(k_drop, (N, EMBED), dtype=jnp.uint32)
    keep_ref = rbits_ref < jnp.asarray(_KEEP_THRESHOLD, dtype=jnp.uint32)
    expected = jnp.where(keep_ref, relu_ref * _DROP_SCALE, 0.0)

    assert jnp.allclose(out, expected, atol=1e-2, rtol=1e-2), \
        "kernel output inconsistent with dropout(relu(fc(avgpool)))"

    print("KERNEL_OK")
</pallas_src>

<mosaic_0001>
module attributes {stable_mosaic.version = 11 : i64} {
  func.func @encoder_head_kernel(%arg0: memref<128x2048xbf16, #tpu.memory_space<vmem>>, %arg1: memref<2048x32xbf16, #tpu.memory_space<vmem>>, %arg2: memref<1x32xf32, #tpu.memory_space<vmem>>, %arg3: memref<2x32xi32, #tpu.memory_space<vmem>>, %arg4: memref<2x32xf32, #tpu.memory_space<vmem>>) attributes {dimension_semantics = [], scalar_prefetch = 0 : i64, scratch_operands = 0 : i64, tpu.core_type = #tpu.core_type<tc>} {
    %c0 = arith.constant 0 : index
    %c0_0 = arith.constant 0 : index
    %0 = vector.load %arg0[%c0, %c0_0] : memref<128x2048xbf16, #tpu.memory_space<vmem>>, vector<128x2048xbf16>
    %c0_1 = arith.constant 0 : index
    %c0_2 = arith.constant 0 : index
    %1 = vector.load %arg1[%c0_1, %c0_2] : memref<2048x32xbf16, #tpu.memory_space<vmem>>, vector<2048x32xbf16>
    %cst = arith.constant dense<0.000000e+00> : vector<128x32xf32>
    %2 = tpu.matmul %0, %1, %cst {dimension_numbers = #tpu.dot_dimension_numbers<[1], [0], [0], [1], [0, 0, 1, 1], [], []>} : vector<128x2048xbf16>, vector<2048x32xbf16>, vector<128x32xf32> -> vector<128x32xf32>
    %3 = vector.shape_cast %2 : vector<128x32xf32> to vector<2x64x32xf32>
    %cst_3 = arith.constant dense<0.000000e+00> : vector<2x32xf32>
    %4 = vector.multi_reduction <add>, %3, %cst_3 [1] : vector<2x64x32xf32> to vector<2x32xf32>
    %c0_4 = arith.constant 0 : index
    %c0_5 = arith.constant 0 : index
    %5 = vector.load %arg2[%c0_4, %c0_5] : memref<1x32xf32, #tpu.memory_space<vmem>>, vector<1x32xf32>
    %6 = vector.broadcast %5 : vector<1x32xf32> to vector<2x32xf32>
    %7 = arith.addf %4, %6 : vector<2x32xf32>
    %cst_6 = arith.constant 0.000000e+00 : f32
    %8 = vector.broadcast %cst_6 : f32 to vector<2x32xf32>
    %9 = arith.maximumf %7, %8 : vector<2x32xf32>
    %c0_7 = arith.constant 0 : index
    %c0_8 = arith.constant 0 : index
    %10 = vector.load %arg3[%c0_7, %c0_8] : memref<2x32xi32, #tpu.memory_space<vmem>>, vector<2x32xi32>
    %c-2147483648_i32 = arith.constant -2147483648 : i32
    %11 = vector.broadcast %c-2147483648_i32 : i32 to vector<2x32xi32>
    %12 = arith.cmpi ult, %10, %11 : vector<2x32xi32>
    %cst_9 = arith.constant 2.000000e+00 : f32
    %13 = vector.broadcast %cst_9 : f32 to vector<2x32xf32>
    %14 = arith.mulf %9, %13 : vector<2x32xf32>
    %cst_10 = arith.constant 0.000000e+00 : f32
    %15 = vector.broadcast %cst_10 : f32 to vector<2x32xf32>
    %16 = arith.select %12, %14, %15 : vector<2x32xi1>, vector<2x32xf32>
    %c0_11 = arith.constant 0 : index
    %c0_12 = arith.constant 0 : index
    %17 = vector.load %arg4[%c0_11, %c0_12] : memref<2x32xf32, #tpu.memory_space<vmem>>, vector<2x32xf32>
    tpu.vector_store %arg4[%c0_11, %c0_12], %16 {strides = array<i32>} : memref<2x32xf32, #tpu.memory_space<vmem>>, vector<2x32xf32>,
    return
  }
}

</mosaic_0001>

<llo_original>
// kernel: tpu_custom_call.1
$region0: #{tpu_custom_call.1}
  #allocation0 [shape = 'u32[]', space=smem, size = 0x4, offset = 0x4, fixed_abs, tag = 'smem constant byte address 0x4 - core index']
  #allocation1 [shape = 'u32[144,128]{1,0:T(1,128)}', space=vmem, size = 0x12000, scoped, tag = 'internal scratch']
  %s0 = inlined_call_operand.vmem [shape: bf16[128,2048], index: 0, kind: input, shape index: {}]
  %s1 = inlined_call_operand.vmem [shape: bf16[2048,32], index: 1, kind: input, shape index: {}]
  %s2 = inlined_call_operand.vmem [shape: f32[1,32], index: 2, kind: input, shape index: {}]
  %s3 = inlined_call_operand.vmem [shape: u32[2,32], index: 3, kind: input, shape index: {}]
  %s4 = inlined_call_operand.hbm [shape: f32[2,32], index: 4, kind: output, shape index: {}]
  %s5 = sld [smem:[#allocation0]]
  $region26: #{tpu_custom_call.1} parent=0
    _
  %s7 = ssub.s32 1, %s5
  %s8 = scalar_select 0, %s7, %s5
  $region1: #{tpu_custom_call.1} parent=0
    #allocation2 [shape = 'u8[1024]{0}', space=vmem, size = 0x400, scoped, tag = 'output window, operand 0, single buffered']
    #allocation3 [shape = 's32[1]{0}', space=sflag, size = 0x4, scoped, tag = 'scoped memory for tpu_custom_call.1']
    %9 = vsyncpa [#allocation3], 0
    // Predicated region
    $region2: #{tpu_custom_call.1} parent=1 // pred_check
      _
    $region3: #{tpu_custom_call.1} parent=1 // pred_check_branch
      %11 = sbr.rel (0) target = $region5
    $region4: #{tpu_custom_call.1} parent=1 // pred_region
      _
    $region5: #{tpu_custom_call.1} parent=1 // pred_fallthru
      _
    // Predicated region
    $region6: #{tpu_custom_call.1} parent=1 // pred_check
      _
    $region7: #{tpu_custom_call.1} parent=1 // pred_check_branch
      %13 = sbr.rel (0) target = $region9
    $region8: #{tpu_custom_call.1} parent=1 // pred_region
      _
    $region9: #{tpu_custom_call.1} parent=1 // pred_fallthru
      _
    // Predicated region
    $region10: #{tpu_custom_call.1} parent=1 // pred_check
      _
    $region11: #{tpu_custom_call.1} parent=1 // pred_check_branch
      %15 = sbr.rel (0) target = $region13
    $region12: #{tpu_custom_call.1} parent=1 // pred_region
      _
    $region13: #{tpu_custom_call.1} parent=1 // pred_fallthru
      _
    // Predicated region
    $region14: #{tpu_custom_call.1} parent=1 // pred_check
      _
    $region15: #{tpu_custom_call.1} parent=1 // pred_check_branch
      %17 = sbr.rel (0) target = $region17
    $region16: #{tpu_custom_call.1} parent=1 // pred_region
      _
    $region17: #{tpu_custom_call.1} parent=1 // pred_fallthru
      _
    %v19 = vld [vmem:[%s0] sm:$0xff]
    %v20 = vld [vmem:[%s0 + $0x8] sm:$0xff]
    %v21 = vld [vmem:[%s0 + $0x10] sm:$0xff]
    %v22 = vld [vmem:[%s0 + $0x18] sm:$0xff]
    %v23 = vld [vmem:[%s0 + $0x20] sm:$0xff]
    %v24 = vld [vmem:[%s0 + $0x28] sm:$0xff]
    %v25 = vld [vmem:[%s0 + $0x30] sm:$0xff]
    %v26 = vld [vmem:[%s0 + $0x38] sm:$0xff]
    %v27 = vld [vmem:[%s0 + $0x40] sm:$0xff]
    %v28 = vld [vmem:[%s0 + $0x48] sm:$0xff]
    %v29 = vld [vmem:[%s0 + $0x50] sm:$0xff]
    %v30 = vld [vmem:[%s0 + $0x58] sm:$0xff]
    %v31 = vld [vmem:[%s0 + $0x60] sm:$0xff]
    %v32 = vld [vmem:[%s0 + $0x68] sm:$0xff]
    %v33 = vld [vmem:[%s0 + $0x70] sm:$0xff]
    %v34 = vld [vmem:[%s0 + $0x78] sm:$0xff]
    %v35 = vld [vmem:[%s0 + $0x80] sm:$0xff]
    %v36 = vld [vmem:[%s0 + $0x88] sm:$0xff]
    %v37 = vld [vmem:[%s0 + $0x90] sm:$0xff]
    %v38 = vld [vmem:[%s0 + $0x98] sm:$0xff]
    %v39 = vld [vmem:[%s0 + $0xa0] sm:$0xff]
    %v40 = vld [vmem:[%s0 + $0xa8] sm:$0xff]
    %v41 = vld [vmem:[%s0 + $0xb0] sm:$0xff]
    %v42 = vld [vmem:[%s0 + $0xb8] sm:$0xff]
    %v43 = vld [vmem:[%s0 + $0xc0] sm:$0xff]
    %v44 = vld [vmem:[%s0 + $0xc8] sm:$0xff]
    %v45 = vld [vmem:[%s0 + $0xd0] sm:$0xff]
    %v46 = vld [vmem:[%s0 + $0xd8] sm:$0xff]
    %v47 = vld [vmem:[%s0 + $0xe0] sm:$0xff]
    %v48 = vld [vmem:[%s0 + $0xe8] sm:$0xff]
    %v49 = vld [vmem:[%s0 + $0xf0] sm:$0xff]
    %v50 = vld [vmem:[%s0 + $0xf8] sm:$0xff]
    %v51 = vld [vmem:[%s0 + $0x100] sm:$0xff]
    %v52 = vld [vmem:[%s0 + $0x108] sm:$0xff]
    %v53 = vld [vmem:[%s0 + $0x110] sm:$0xff]
    %v54 = vld [vmem:[%s0 + $0x118] sm:$0xff]
    %v55 = vld [vmem:[%s0 + $0x120] sm:$0xff]
    %v56 = vld [vmem:[%s0 + $0x128] sm:$0xff]
    %v57 = vld [vmem:[%s0 + $0x130] sm:$0xff]
    %v58 = vld [vmem:[%s0 + $0x138] sm:$0xff]
    %v59 = vld [vmem:[%s0 + $0x140] sm:$0xff]
    %v60 = vld [vmem:[%s0 + $0x148] sm:$0xff]
    %v61 = vld [vmem:[%s0 + $0x150] sm:$0xff]
    %v62 = vld [vmem:[%s0 + $0x158] sm:$0xff]
    %v63 = vld [vmem:[%s0 + $0x160] sm:$0xff]
    %v64 = vld [vmem:[%s0 + $0x168] sm:$0xff]
    %v65 = vld [vmem:[%s0 + $0x170] sm:$0xff]
    %v66 = vld [vmem:[%s0 + $0x178] sm:$0xff]
    %v67 = vld [vmem:[%s0 + $0x180] sm:$0xff]
    %v68 = vld [vmem:[%s0 + $0x188] sm:$0xff]
    %v69 = vld [vmem:[%s0 + $0x190] sm:$0xff]
    %v70 = vld [vmem:[%s0 + $0x198] sm:$0xff]
    %v71 = vld [vmem:[%s0 + $0x1a0] sm:$0xff]
    %v72 = vld [vmem:[%s0 + $0x1a8] sm:$0xff]
    %v73 = vld [vmem:[%s0 + $0x1b0] sm:$0xff]
    %v74 = vld [vmem:[%s0 + $0x1b8] sm:$0xff]
    %v75 = vld [vmem:[%s0 + $0x1c0] sm:$0xff]
    %v76 = vld [vmem:[%s0 + $0x1c8] sm:$0xff]
    %v77 = vld [vmem:[%s0 + $0x1d0] sm:$0xff]
    %v78 = vld [vmem:[%s0 + $0x1d8] sm:$0xff]
    %v79 = vld [vmem:[%s0 + $0x1e0] sm:$0xff]
    %v80 = vld [vmem:[%s0 + $0x1e8] sm:$0xff]
    %v81 = vld [vmem:[%s0 + $0x1f0] sm:$0xff]
    %v82 = vld [vmem:[%s0 + $0x1f8] sm:$0xff]
    %v83 = vld [vmem:[%s0 + $0x200] sm:$0xff]
    %v84 = vld [vmem:[%s0 + $0x208] sm:$0xff]
    %v85 = vld [vmem:[%s0 + $0x210] sm:$0xff]
    %v86 = vld [vmem:[%s0 + $0x218] sm:$0xff]
    %v87 = vld [vmem:[%s0 + $0x220] sm:$0xff]
    %v88 = vld [vmem:[%s0 + $0x228] sm:$0xff]
    %v89 = vld [vmem:[%s0 + $0x230] sm:$0xff]
    %v90 = vld [vmem:[%s0 + $0x238] sm:$0xff]
    %v91 = vld [vmem:[%s0 + $0x240] sm:$0xff]
    %v92 = vld [vmem:[%s0 + $0x248] sm:$0xff]
    %v93 = vld [vmem:[%s0 + $0x250] sm:$0xff]
    %v94 = vld [vmem:[%s0 + $0x258] sm:$0xff]
    %v95 = vld [vmem:[%s0 + $0x260] sm:$0xff]
    %v96 = vld [vmem:[%s0 + $0x268] sm:$0xff]
    %v97 = vld [vmem:[%s0 + $0x270] sm:$0xff]
    %v98 = vld [vmem:[%s0 + $0x278] sm:$0xff]
    %v99 = vld [vmem:[%s0 + $0x280] sm:$0xff]
    %v100 = vld [vmem:[%s0 + $0x288] sm:$0xff]
    %v101 = vld [vmem:[%s0 + $0x290] sm:$0xff]
    %v102 = vld [vmem:[%s0 + $0x298] sm:$0xff]
    %v103 = vld [vmem:[%s0 + $0x2a0] sm:$0xff]
    %v104 = vld [vmem:[%s0 + $0x2a8] sm:$0xff]
    %v105 = vld [vmem:[%s0 + $0x2b0] sm:$0xff]
    %v106 = vld [vmem:[%s0 + $0x2b8] sm:$0xff]
    %v107 = vld [vmem:[%s0 + $0x2c0] sm:$0xff]
    %v108 = vld [vmem:[%s0 + $0x2c8] sm:$0xff]
    %v109 = vld [vmem:[%s0 + $0x2d0] sm:$0xff]
    %v110 = vld [vmem:[%s0 + $0x2d8] sm:$0xff]
    %v111 = vld [vmem:[%s0 + $0x2e0] sm:$0xff]
    %v112 = vld [vmem:[%s0 + $0x2e8] sm:$0xff]
    %v113 = vld [vmem:[%s0 + $0x2f0] sm:$0xff]
    %v114 = vld [vmem:[%s0 + $0x2f8] sm:$0xff]
    %v115 = vld [vmem:[%s0 + $0x300] sm:$0xff]
    %v116 = vld [vmem:[%s0 + $0x308] sm:$0xff]
    %v117 = vld [vmem:[%s0 + $0x310] sm:$0xff]
    %v118 = vld [vmem:[%s0 + $0x318] sm:$0xff]
    %v119 = vld [vmem:[%s0 + $0x320] sm:$0xff]
    %v120 = vld [vmem:[%s0 + $0x328] sm:$0xff]
    %v121 = vld [vmem:[%s0 + $0x330] sm:$0xff]
    %v122 = vld [vmem:[%s0 + $0x338] sm:$0xff]
    %v123 = vld [vmem:[%s0 + $0x340] sm:$0xff]
    %v124 = vld [vmem:[%s0 + $0x348] sm:$0xff]
    %v125 = vld [vmem:[%s0 + $0x350] sm:$0xff]
    %v126 = vld [vmem:[%s0 + $0x358] sm:$0xff]
    %v127 = vld [vmem:[%s0 + $0x360] sm:$0xff]
    %v128 = vld [vmem:[%s0 + $0x368] sm:$0xff]
    %v129 = vld [vmem:[%s0 + $0x370] sm:$0xff]
    %v130 = vld [vmem:[%s0 + $0x378] sm:$0xff]
    %v131 = vld [vmem:[%s0 + $0x380] sm:$0xff]
    %v132 = vld [vmem:[%s0 + $0x388] sm:$0xff]
    %v133 = vld [vmem:[%s0 + $0x390] sm:$0xff]
    %v134 = vld [vmem:[%s0 + $0x398] sm:$0xff]
    %v135 = vld [vmem:[%s0 + $0x3a0] sm:$0xff]
    %v136 = vld [vmem:[%s0 + $0x3a8] sm:$0xff]
    %v137 = vld [vmem:[%s0 + $0x3b0] sm:$0xff]
    %v138 = vld [vmem:[%s0 + $0x3b8] sm:$0xff]
    %v139 = vld [vmem:[%s0 + $0x3c0] sm:$0xff]
    %v140 = vld [vmem:[%s0 + $0x3c8] sm:$0xff]
    %v141 = vld [vmem:[%s0 + $0x3d0] sm:$0xff]
    %v142 = vld [vmem:[%s0 + $0x3d8] sm:$0xff]
    %v143 = vld [vmem:[%s0 + $0x3e0] sm:$0xff]
    %v144 = vld [vmem:[%s0 + $0x3e8] sm:$0xff]
    %v145 = vld [vmem:[%s0 + $0x3f0] sm:$0xff]
    %v146 = vld [vmem:[%s0 + $0x3f8] sm:$0xff]
    %v147 = vld [vmem:[%s1] sm:$0xf]
    %v148 = vld [vmem:[%s1 + $0x4] sm:$0xf]
    %v149 = vld [vmem:[%s1 + $0x8] sm:$0xf]
    %v150 = vld [vmem:[%s1 + $0xc] sm:$0xf]
    %v151 = vld [vmem:[%s1 + $0x10] sm:$0xf]
    %v152 = vld [vmem:[%s1 + $0x14] sm:$0xf]
    %v153 = vld [vmem:[%s1 + $0x18] sm:$0xf]
    %v154 = vld [vmem:[%s1 + $0x1c] sm:$0xf]
    %v155 = vld [vmem:[%s1 + $0x20] sm:$0xf]
    %v156 = vld [vmem:[%s1 + $0x24] sm:$0xf]
    %v157 = vld [vmem:[%s1 + $0x28] sm:$0xf]
    %v158 = vld [vmem:[%s1 + $0x2c] sm:$0xf]
    %v159 = vld [vmem:[%s1 + $0x30] sm:$0xf]
    %v160 = vld [vmem:[%s1 + $0x34] sm:$0xf]
    %v161 = vld [vmem:[%s1 + $0x38] sm:$0xf]
    %v162 = vld [vmem:[%s1 + $0x3c] sm:$0xf]
    %v163 = vld [vmem:[%s1 + $0x40] sm:$0xf]
    %v164 = vld [vmem:[%s1 + $0x44] sm:$0xf]
    %v165 = vld [vmem:[%s1 + $0x48] sm:$0xf]
    %v166 = vld [vmem:[%s1 + $0x4c] sm:$0xf]
    %v167 = vld [vmem:[%s1 + $0x50] sm:$0xf]
    %v168 = vld [vmem:[%s1 + $0x54] sm:$0xf]
    %v169 = vld [vmem:[%s1 + $0x58] sm:$0xf]
    %v170 = vld [vmem:[%s1 + $0x5c] sm:$0xf]
    %v171 = vld [vmem:[%s1 + $0x60] sm:$0xf]
    %v172 = vld [vmem:[%s1 + $0x64] sm:$0xf]
    %v173 = vld [vmem:[%s1 + $0x68] sm:$0xf]
    %v174 = vld [vmem:[%s1 + $0x6c] sm:$0xf]
    %v175 = vld [vmem:[%s1 + $0x70] sm:$0xf]
    %v176 = vld [vmem:[%s1 + $0x74] sm:$0xf]
    %v177 = vld [vmem:[%s1 + $0x78] sm:$0xf]
    %v178 = vld [vmem:[%s1 + $0x7c] sm:$0xf]
    %v179 = vld [vmem:[%s1 + $0x80] sm:$0xf]
    %v180 = vld [vmem:[%s1 + $0x84] sm:$0xf]
    %v181 = vld [vmem:[%s1 + $0x88] sm:$0xf]
    %v182 = vld [vmem:[%s1 + $0x8c] sm:$0xf]
    %v183 = vld [vmem:[%s1 + $0x90] sm:$0xf]
    %v184 = vld [vmem:[%s1 + $0x94] sm:$0xf]
    %v185 = vld [vmem:[%s1 + $0x98] sm:$0xf]
    %v186 = vld [vmem:[%s1 + $0x9c] sm:$0xf]
    %v187 = vld [vmem:[%s1 + $0xa0] sm:$0xf]
    %v188 = vld [vmem:[%s1 + $0xa4] sm:$0xf]
    %v189 = vld [vmem:[%s1 + $0xa8] sm:$0xf]
    %v190 = vld [vmem:[%s1 + $0xac] sm:$0xf]
    %v191 = vld [vmem:[%s1 + $0xb0] sm:$0xf]
    %v192 = vld [vmem:[%s1 + $0xb4] sm:$0xf]
    %v193 = vld [vmem:[%s1 + $0xb8] sm:$0xf]
    %v194 = vld [vmem:[%s1 + $0xbc] sm:$0xf]
    %v195 = vld [vmem:[%s1 + $0xc0] sm:$0xf]
    %v196 = vld [vmem:[%s1 + $0xc4] sm:$0xf]
    %v197 = vld [vmem:[%s1 + $0xc8] sm:$0xf]
    %v198 = vld [vmem:[%s1 + $0xcc] sm:$0xf]
    %v199 = vld [vmem:[%s1 + $0xd0] sm:$0xf]
    %v200 = vld [vmem:[%s1 + $0xd4] sm:$0xf]
    %v201 = vld [vmem:[%s1 + $0xd8] sm:$0xf]
    %v202 = vld [vmem:[%s1 + $0xdc] sm:$0xf]
    %v203 = vld [vmem:[%s1 + $0xe0] sm:$0xf]
    %v204 = vld [vmem:[%s1 + $0xe4] sm:$0xf]
    %v205 = vld [vmem:[%s1 + $0xe8] sm:$0xf]
    %v206 = vld [vmem:[%s1 + $0xec] sm:$0xf]
    %v207 = vld [vmem:[%s1 + $0xf0] sm:$0xf]
    %v208 = vld [vmem:[%s1 + $0xf4] sm:$0xf]
    %v209 = vld [vmem:[%s1 + $0xf8] sm:$0xf]
    %v210 = vld [vmem:[%s1 + $0xfc] sm:$0xf]
    %v211 = vld [vmem:[%s1 + $0x100] sm:$0xf]
    %v212 = vld [vmem:[%s1 + $0x104] sm:$0xf]
    %v213 = vld [vmem:[%s1 + $0x108] sm:$0xf]
    %v214 = vld [vmem:[%s1 + $0x10c] sm:$0xf]
    %v215 = vld [vmem:[%s1 + $0x110] sm:$0xf]
    %v216 = vld [vmem:[%s1 + $0x114] sm:$0xf]
    %v217 = vld [vmem:[%s1 + $0x118] sm:$0xf]
    %v218 = vld [vmem:[%s1 + $0x11c] sm:$0xf]
    %v219 = vld [vmem:[%s1 + $0x120] sm:$0xf]
    %v220 = vld [vmem:[%s1 + $0x124] sm:$0xf]
    %v221 = vld [vmem:[%s1 + $0x128] sm:$0xf]
    %v222 = vld [vmem:[%s1 + $0x12c] sm:$0xf]
    %v223 = vld [vmem:[%s1 + $0x130] sm:$0xf]
    %v224 = vld [vmem:[%s1 + $0x134] sm:$0xf]
    %v225 = vld [vmem:[%s1 + $0x138] sm:$0xf]
    %v226 = vld [vmem:[%s1 + $0x13c] sm:$0xf]
    %v227 = vld [vmem:[%s1 + $0x140] sm:$0xf]
    %v228 = vld [vmem:[%s1 + $0x144] sm:$0xf]
    %v229 = vld [vmem:[%s1 + $0x148] sm:$0xf]
    %v230 = vld [vmem:[%s1 + $0x14c] sm:$0xf]
    %v231 = vld [vmem:[%s1 + $0x150] sm:$0xf]
    %v232 = vld [vmem:[%s1 + $0x154] sm:$0xf]
    %v233 = vld [vmem:[%s1 + $0x158] sm:$0xf]
    %v234 = vld [vmem:[%s1 + $0x15c] sm:$0xf]
    %v235 = vld [vmem:[%s1 + $0x160] sm:$0xf]
    %v236 = vld [vmem:[%s1 + $0x164] sm:$0xf]
    %v237 = vld [vmem:[%s1 + $0x168] sm:$0xf]
    %v238 = vld [vmem:[%s1 + $0x16c] sm:$0xf]
    %v239 = vld [vmem:[%s1 + $0x170] sm:$0xf]
    %v240 = vld [vmem:[%s1 + $0x174] sm:$0xf]
    %v241 = vld [vmem:[%s1 + $0x178] sm:$0xf]
    %v242 = vld [vmem:[%s1 + $0x17c] sm:$0xf]
    %v243 = vld [vmem:[%s1 + $0x180] sm:$0xf]
    %v244 = vld [vmem:[%s1 + $0x184] sm:$0xf]
    %v245 = vld [vmem:[%s1 + $0x188] sm:$0xf]
    %v246 = vld [vmem:[%s1 + $0x18c] sm:$0xf]
    %v247 = vld [vmem:[%s1 + $0x190] sm:$0xf]
    %v248 = vld [vmem:[%s1 + $0x194] sm:$0xf]
    %v249 = vld [vmem:[%s1 + $0x198] sm:$0xf]
    %v250 = vld [vmem:[%s1 + $0x19c] sm:$0xf]
    %v251 = vld [vmem:[%s1 + $0x1a0] sm:$0xf]
    %v252 = vld [vmem:[%s1 + $0x1a4] sm:$0xf]
    %v253 = vld [vmem:[%s1 + $0x1a8] sm:$0xf]
    %v254 = vld [vmem:[%s1 + $0x1ac] sm:$0xf]
    %v255 = vld [vmem:[%s1 + $0x1b0] sm:$0xf]
    %v256 = vld [vmem:[%s1 + $0x1b4] sm:$0xf]
    %v257 = vld [vmem:[%s1 + $0x1b8] sm:$0xf]
    %v258 = vld [vmem:[%s1 + $0x1bc] sm:$0xf]
    %v259 = vld [vmem:[%s1 + $0x1c0] sm:$0xf]
    %v260 = vld [vmem:[%s1 + $0x1c4] sm:$0xf]
    %v261 = vld [vmem:[%s1 + $0x1c8] sm:$0xf]
    %v262 = vld [vmem:[%s1 + $0x1cc] sm:$0xf]
    %v263 = vld [vmem:[%s1 + $0x1d0] sm:$0xf]
    %v264 = vld [vmem:[%s1 + $0x1d4] sm:$0xf]
    %v265 = vld [vmem:[%s1 + $0x1d8] sm:$0xf]
    %v266 = vld [vmem:[%s1 + $0x1dc] sm:$0xf]
    %v267 = vld [vmem:[%s1 + $0x1e0] sm:$0xf]
    %v268 = vld [vmem:[%s1 + $0x1e4] sm:$0xf]
    %v269 = vld [vmem:[%s1 + $0x1e8] sm:$0xf]
    %v270 = vld [vmem:[%s1 + $0x1ec] sm:$0xf]
    %v271 = vld [vmem:[%s1 + $0x1f0] sm:$0xf]
    %v272 = vld [vmem:[%s1 + $0x1f4] sm:$0xf]
    %v273 = vld [vmem:[%s1 + $0x1f8] sm:$0xf]
    %v274 = vld [vmem:[%s1 + $0x1fc] sm:$0xf]
    %v275 = vld [vmem:[%s1 + $0x200] sm:$0xf]
    %v276 = vld [vmem:[%s1 + $0x204] sm:$0xf]
    %v277 = vld [vmem:[%s1 + $0x208] sm:$0xf]
    %v278 = vld [vmem:[%s1 + $0x20c] sm:$0xf]
    %v279 = vld [vmem:[%s1 + $0x210] sm:$0xf]
    %v280 = vld [vmem:[%s1 + $0x214] sm:$0xf]
    %v281 = vld [vmem:[%s1 + $0x218] sm:$0xf]
    %v282 = vld [vmem:[%s1 + $0x21c] sm:$0xf]
    %v283 = vld [vmem:[%s1 + $0x220] sm:$0xf]
    %v284 = vld [vmem:[%s1 + $0x224] sm:$0xf]
    %v285 = vld [vmem:[%s1 + $0x228] sm:$0xf]
    %v286 = vld [vmem:[%s1 + $0x22c] sm:$0xf]
    %v287 = vld [vmem:[%s1 + $0x230] sm:$0xf]
    %v288 = vld [vmem:[%s1 + $0x234] sm:$0xf]
    %v289 = vld [vmem:[%s1 + $0x238] sm:$0xf]
    %v290 = vld [vmem:[%s1 + $0x23c] sm:$0xf]
    %v291 = vld [vmem:[%s1 + $0x240] sm:$0xf]
    %v292 = vld [vmem:[%s1 + $0x244] sm:$0xf]
    %v293 = vld [vmem:[%s1 + $0x248] sm:$0xf]
    %v294 = vld [vmem:[%s1 + $0x24c] sm:$0xf]
    %v295 = vld [vmem:[%s1 + $0x250] sm:$0xf]
    %v296 = vld [vmem:[%s1 + $0x254] sm:$0xf]
    %v297 = vld [vmem:[%s1 + $0x258] sm:$0xf]
    %v298 = vld [vmem:[%s1 + $0x25c] sm:$0xf]
    %v299 = vld [vmem:[%s1 + $0x260] sm:$0xf]
    %v300 = vld [vmem:[%s1 + $0x264] sm:$0xf]
    %v301 = vld [vmem:[%s1 + $0x268] sm:$0xf]
    %v302 = vld [vmem:[%s1 + $0x26c] sm:$0xf]
    %v303 = vld [vmem:[%s1 + $0x270] sm:$0xf]
    %v304 = vld [vmem:[%s1 + $0x274] sm:$0xf]
    %v305 = vld [vmem:[%s1 + $0x278] sm:$0xf]
    %v306 = vld [vmem:[%s1 + $0x27c] sm:$0xf]
    %v307 = vld [vmem:[%s1 + $0x280] sm:$0xf]
    %v308 = vld [vmem:[%s1 + $0x284] sm:$0xf]
    %v309 = vld [vmem:[%s1 + $0x288] sm:$0xf]
    %v310 = vld [vmem:[%s1 + $0x28c] sm:$0xf]
    %v311 = vld [vmem:[%s1 + $0x290] sm:$0xf]
    %v312 = vld [vmem:[%s1 + $0x294] sm:$0xf]
    %v313 = vld [vmem:[%s1 + $0x298] sm:$0xf]
    %v314 = vld [vmem:[%s1 + $0x29c] sm:$0xf]
    %v315 = vld [vmem:[%s1 + $0x2a0] sm:$0xf]
    %v316 = vld [vmem:[%s1 + $0x2a4] sm:$0xf]
    %v317 = vld [vmem:[%s1 + $0x2a8] sm:$0xf]
    %v318 = vld [vmem:[%s1 + $0x2ac] sm:$0xf]
    %v319 = vld [vmem:[%s1 + $0x2b0] sm:$0xf]
    %v320 = vld [vmem:[%s1 + $0x2b4] sm:$0xf]
    %v321 = vld [vmem:[%s1 + $0x2b8] sm:$0xf]
    %v322 = vld [vmem:[%s1 + $0x2bc] sm:$0xf]
    %v323 = vld [vmem:[%s1 + $0x2c0] sm:$0xf]
    %v324 = vld [vmem:[%s1 + $0x2c4] sm:$0xf]
    %v325 = vld [vmem:[%s1 + $0x2c8] sm:$0xf]
    %v326 = vld [vmem:[%s1 + $0x2cc] sm:$0xf]
    %v327 = vld [vmem:[%s1 + $0x2d0] sm:$0xf]
    %v328 = vld [vmem:[%s1 + $0x2d4] sm:$0xf]
    %v329 = vld [vmem:[%s1 + $0x2d8] sm:$0xf]
    %v330 = vld [vmem:[%s1 + $0x2dc] sm:$0xf]
    %v331 = vld [vmem:[%s1 + $0x2e0] sm:$0xf]
    %v332 = vld [vmem:[%s1 + $0x2e4] sm:$0xf]
    %v333 = vld [vmem:[%s1 + $0x2e8] sm:$0xf]
    %v334 = vld [vmem:[%s1 + $0x2ec] sm:$0xf]
    %v335 = vld [vmem:[%s1 + $0x2f0] sm:$0xf]
    %v336 = vld [vmem:[%s1 + $0x2f4] sm:$0xf]
    %v337 = vld [vmem:[%s1 + $0x2f8] sm:$0xf]
    %v338 = vld [vmem:[%s1 + $0x2fc] sm:$0xf]
    %v339 = vld [vmem:[%s1 + $0x300] sm:$0xf]
    %v340 = vld [vmem:[%s1 + $0x304] sm:$0xf]
    %v341 = vld [vmem:[%s1 + $0x308] sm:$0xf]
    %v342 = vld [vmem:[%s1 + $0x30c] sm:$0xf]
    %v343 = vld [vmem:[%s1 + $0x310] sm:$0xf]
    %v344 = vld [vmem:[%s1 + $0x314] sm:$0xf]
    %v345 = vld [vmem:[%s1 + $0x318] sm:$0xf]
    %v346 = vld [vmem:[%s1 + $0x31c] sm:$0xf]
    %v347 = vld [vmem:[%s1 + $0x320] sm:$0xf]
    %v348 = vld [vmem:[%s1 + $0x324] sm:$0xf]
    %v349 = vld [vmem:[%s1 + $0x328] sm:$0xf]
    %v350 = vld [vmem:[%s1 + $0x32c] sm:$0xf]
    %v351 = vld [vmem:[%s1 + $0x330] sm:$0xf]
    %v352 = vld [vmem:[%s1 + $0x334] sm:$0xf]
    %v353 = vld [vmem:[%s1 + $0x338] sm:$0xf]
    %v354 = vld [vmem:[%s1 + $0x33c] sm:$0xf]
    %v355 = vld [vmem:[%s1 + $0x340] sm:$0xf]
    %v356 = vld [vmem:[%s1 + $0x344] sm:$0xf]
    %v357 = vld [vmem:[%s1 + $0x348] sm:$0xf]
    %v358 = vld [vmem:[%s1 + $0x34c] sm:$0xf]
    %v359 = vld [vmem:[%s1 + $0x350] sm:$0xf]
    %v360 = vld [vmem:[%s1 + $0x354] sm:$0xf]
    %v361 = vld [vmem:[%s1 + $0x358] sm:$0xf]
    %v362 = vld [vmem:[%s1 + $0x35c] sm:$0xf]
    %v363 = vld [vmem:[%s1 + $0x360] sm:$0xf]
    %v364 = vld [vmem:[%s1 + $0x364] sm:$0xf]
    %v365 = vld [vmem:[%s1 + $0x368] sm:$0xf]
    %v366 = vld [vmem:[%s1 + $0x36c] sm:$0xf]
    %v367 = vld [vmem:[%s1 + $0x370] sm:$0xf]
    %v368 = vld [vmem:[%s1 + $0x374] sm:$0xf]
    %v369 = vld [vmem:[%s1 + $0x378] sm:$0xf]
    %v370 = vld [vmem:[%s1 + $0x37c] sm:$0xf]
    %v371 = vld [vmem:[%s1 + $0x380] sm:$0xf]
    %v372 = vld [vmem:[%s1 + $0x384] sm:$0xf]
    %v373 = vld [vmem:[%s1 + $0x388] sm:$0xf]
    %v374 = vld [vmem:[%s1 + $0x38c] sm:$0xf]
    %v375 = vld [vmem:[%s1 + $0x390] sm:$0xf]
    %v376 = vld [vmem:[%s1 + $0x394] sm:$0xf]
    %v377 = vld [vmem:[%s1 + $0x398] sm:$0xf]
    %v378 = vld [vmem:[%s1 + $0x39c] sm:$0xf]
    %v379 = vld [vmem:[%s1 + $0x3a0] sm:$0xf]
    %v380 = vld [vmem:[%s1 + $0x3a4] sm:$0xf]
    %v381 = vld [vmem:[%s1 + $0x3a8] sm:$0xf]
    %v382 = vld [vmem:[%s1 + $0x3ac] sm:$0xf]
    %v383 = vld [vmem:[%s1 + $0x3b0] sm:$0xf]
    %v384 = vld [vmem:[%s1 + $0x3b4] sm:$0xf]
    %v385 = vld [vmem:[%s1 + $0x3b8] sm:$0xf]
    %v386 = vld [vmem:[%s1 + $0x3bc] sm:$0xf]
    %v387 = vld [vmem:[%s1 + $0x3c0] sm:$0xf]
    %v388 = vld [vmem:[%s1 + $0x3c4] sm:$0xf]
    %v389 = vld [vmem:[%s1 + $0x3c8] sm:$0xf]
    %v390 = vld [vmem:[%s1 + $0x3cc] sm:$0xf]
    %v391 = vld [vmem:[%s1 + $0x3d0] sm:$0xf]
    %v392 = vld [vmem:[%s1 + $0x3d4] sm:$0xf]
    %v393 = vld [vmem:[%s1 + $0x3d8] sm:$0xf]
    %v394 = vld [vmem:[%s1 + $0x3dc] sm:$0xf]
    %v395 = vld [vmem:[%s1 + $0x3e0] sm:$0xf]
    %v396 = vld [vmem:[%s1 + $0x3e4] sm:$0xf]
    %v397 = vld [vmem:[%s1 + $0x3e8] sm:$0xf]
    %v398 = vld [vmem:[%s1 + $0x3ec] sm:$0xf]
    %v399 = vld [vmem:[%s1 + $0x3f0] sm:$0xf]
    %v400 = vld [vmem:[%s1 + $0x3f4] sm:$0xf]
    %v401 = vld [vmem:[%s1 + $0x3f8] sm:$0xf]
    %v402 = vld [vmem:[%s1 + $0x3fc] sm:$0xf]
    %v531 = vunpack.c.l.b16 %v19
    %v532 = vunpack.c.h.b16 %v19
    %v533 = vunpack.c.l.b16 %v20
    %v534 = vunpack.c.h.b16 %v20
    %v535 = vunpack.c.l.b16 %v21
    %v536 = vunpack.c.h.b16 %v21
    %v537 = vunpack.c.l.b16 %v22
    %v538 = vunpack.c.h.b16 %v22
    %v539 = vunpack.c.l.b16 %v23
    %v540 = vunpack.c.h.b16 %v23
    %v541 = vunpack.c.l.b16 %v24
    %v542 = vunpack.c.h.b16 %v24
    %v543 = vunpack.c.l.b16 %v25
    %v544 = vunpack.c.h.b16 %v25
    %v545 = vunpack.c.l.b16 %v26
    %v546 = vunpack.c.h.b16 %v26
    %v547 = vunpack.c.l.b16 %v27
    %v548 = vunpack.c.h.b16 %v27
    %v549 = vunpack.c.l.b16 %v28
    %v550 = vunpack.c.h.b16 %v28
    %v551 = vunpack.c.l.b16 %v29
    %v552 = vunpack.c.h.b16 %v29
    %v553 = vunpack.c.l.b16 %v30
    %v554 = vunpack.c.h.b16 %v30
    %v555 = vunpack.c.l.b16 %v31
    %v556 = vunpack.c.h.b16 %v31
    %v557 = vunpack.c.l.b16 %v32
    %v558 = vunpack.c.h.b16 %v32
    %v559 = vunpack.c.l.b16 %v33
    %v560 = vunpack.c.h.b16 %v33
    %v561 = vunpack.c.l.b16 %v34
    %v562 = vunpack.c.h.b16 %v34
    %v563 = vunpack.c.l.b16 %v35
    %v564 = vunpack.c.h.b16 %v35
    %v565 = vunpack.c.l.b16 %v36
    %v566 = vunpack.c.h.b16 %v36
    %v567 = vunpack.c.l.b16 %v37
    %v568 = vunpack.c.h.b16 %v37
    %v569 = vunpack.c.l.b16 %v38
    %v570 = vunpack.c.h.b16 %v38
    %v571 = vunpack.c.l.b16 %v39
    %v572 = vunpack.c.h.b16 %v39
    %v573 = vunpack.c.l.b16 %v40
    %v574 = vunpack.c.h.b16 %v40
    %v575 = vunpack.c.l.b16 %v41
    %v576 = vunpack.c.h.b16 %v41
    %v577 = vunpack.c.l.b16 %v42
    %v578 = vunpack.c.h.b16 %v42
    %v579 = vunpack.c.l.b16 %v43
    %v580 = vunpack.c.h.b16 %v43
    %v581 = vunpack.c.l.b16 %v44
    %v582 = vunpack.c.h.b16 %v44
    %v583 = vunpack.c.l.b16 %v45
    %v584 = vunpack.c.h.b16 %v45
    %v585 = vunpack.c.l.b16 %v46
    %v586 = vunpack.c.h.b16 %v46
    %v587 = vunpack.c.l.b16 %v47
    %v588 = vunpack.c.h.b16 %v47
    %v589 = vunpack.c.l.b16 %v48
    %v590 = vunpack.c.h.b16 %v48
    %v591 = vunpack.c.l.b16 %v49
    %v592 = vunpack.c.h.b16 %v49
    %v593 = vunpack.c.l.b16 %v50
    %v594 = vunpack.c.h.b16 %v50
    %v595 = vunpack.c.l.b16 %v51
    %v596 = vunpack.c.h.b16 %v51
    %v597 = vunpack.c.l.b16 %v52
    %v598 = vunpack.c.h.b16 %v52
    %v599 = vunpack.c.l.b16 %v53
    %v600 = vunpack.c.h.b16 %v53
    %v601 = vunpack.c.l.b16 %v54
    %v602 = vunpack.c.h.b16 %v54
    %v603 = vunpack.c.l.b16 %v55
    %v604 = vunpack.c.h.b16 %v55
    %v605 = vunpack.c.l.b16 %v56
    %v606 = vunpack.c.h.b16 %v56
    %v607 = vunpack.c.l.b16 %v57
    %v608 = vunpack.c.h.b16 %v57
    %v609 = vunpack.c.l.b16 %v58
    %v610 = vunpack.c.h.b16 %v58
    %v611 = vunpack.c.l.b16 %v59
    %v612 = vunpack.c.h.b16 %v59
    %v613 = vunpack.c.l.b16 %v60
    %v614 = vunpack.c.h.b16 %v60
    %v615 = vunpack.c.l.b16 %v61
    %v616 = vunpack.c.h.b16 %v61
    %v617 = vunpack.c.l.b16 %v62
    %v618 = vunpack.c.h.b16 %v62
    %v619 = vunpack.c.l.b16 %v63
    %v620 = vunpack.c.h.b16 %v63
    %v621 = vunpack.c.l.b16 %v64
    %v622 = vunpack.c.h.b16 %v64
    %v623 = vunpack.c.l.b16 %v65
    %v624 = vunpack.c.h.b16 %v65
    %v625 = vunpack.c.l.b16 %v66
    %v626 = vunpack.c.h.b16 %v66
    %v627 = vunpack.c.l.b16 %v67
    %v628 = vunpack.c.h.b16 %v67
    %v629 = vunpack.c.l.b16 %v68
    %v630 = vunpack.c.h.b16 %v68
    %v631 = vunpack.c.l.b16 %v69
    %v632 = vunpack.c.h.b16 %v69
    %v633 = vunpack.c.l.b16 %v70
    %v634 = vunpack.c.h.b16 %v70
    %v635 = vunpack.c.l.b16 %v71
    %v636 = vunpack.c.h.b16 %v71
    %v637 = vunpack.c.l.b16 %v72
    %v638 = vunpack.c.h.b16 %v72
    %v639 = vunpack.c.l.b16 %v73
    %v640 = vunpack.c.h.b16 %v73
    %v641 = vunpack.c.l.b16 %v74
    %v642 = vunpack.c.h.b16 %v74
    %v643 = vunpack.c.l.b16 %v75
    %v644 = vunpack.c.h.b16 %v75
    %v645 = vunpack.c.l.b16 %v76
    %v646 = vunpack.c.h.b16 %v76
    %v647 = vunpack.c.l.b16 %v77
    %v648 = vunpack.c.h.b16 %v77
    %v649 = vunpack.c.l.b16 %v78
    %v650 = vunpack.c.h.b16 %v78
    %v651 = vunpack.c.l.b16 %v79
    %v652 = vunpack.c.h.b16 %v79
    %v653 = vunpack.c.l.b16 %v80
    %v654 = vunpack.c.h.b16 %v80
    %v655 = vunpack.c.l.b16 %v81
    %v656 = vunpack.c.h.b16 %v81
    %v657 = vunpack.c.l.b16 %v82
    %v658 = vunpack.c.h.b16 %v82
    %v659 = vunpack.c.l.b16 %v83
    %v660 = vunpack.c.h.b16 %v83
    %v661 = vunpack.c.l.b16 %v84
    %v662 = vunpack.c.h.b16 %v84
    %v663 = vunpack.c.l.b16 %v85
    %v664 = vunpack.c.h.b16 %v85
    %v665 = vunpack.c.l.b16 %v86
    %v666 = vunpack.c.h.b16 %v86
    %v667 = vunpack.c.l.b16 %v87
    %v668 = vunpack.c.h.b16 %v87
    %v669 = vunpack.c.l.b16 %v88
    %v670 = vunpack.c.h.b16 %v88
    %v671 = vunpack.c.l.b16 %v89
    %v672 = vunpack.c.h.b16 %v89
    %v673 = vunpack.c.l.b16 %v90
    %v674 = vunpack.c.h.b16 %v90
    %v675 = vunpack.c.l.b16 %v91
    %v676 = vunpack.c.h.b16 %v91
    %v677 = vunpack.c.l.b16 %v92
    %v678 = vunpack.c.h.b16 %v92
    %v679 = vunpack.c.l.b16 %v93
    %v680 = vunpack.c.h.b16 %v93
    %v681 = vunpack.c.l.b16 %v94
    %v682 = vunpack.c.h.b16 %v94
    %v683 = vunpack.c.l.b16 %v95
    %v684 = vunpack.c.h.b16 %v95
    %v685 = vunpack.c.l.b16 %v96
    %v686 = vunpack.c.h.b16 %v96
    %v687 = vunpack.c.l.b16 %v97
    %v688 = vunpack.c.h.b16 %v97
    %v689 = vunpack.c.l.b16 %v98
    %v690 = vunpack.c.h.b16 %v98
    %v691 = vunpack.c.l.b16 %v99
    %v692 = vunpack.c.h.b16 %v99
    %v693 = vunpack.c.l.b16 %v100
    %v694 = vunpack.c.h.b16 %v100
    %v695 = vunpack.c.l.b16 %v101
    %v696 = vunpack.c.h.b16 %v101
    %v697 = vunpack.c.l.b16 %v102
    %v698 = vunpack.c.h.b16 %v102
    %v699 = vunpack.c.l.b16 %v103
    %v700 = vunpack.c.h.b16 %v103
    %v701 = vunpack.c.l.b16 %v104
    %v702 = vunpack.c.h.b16 %v104
    %v703 = vunpack.c.l.b16 %v105
    %v704 = vunpack.c.h.b16 %v105
    %v705 = vunpack.c.l.b16 %v106
    %v706 = vunpack.c.h.b16 %v106
    %v707 = vunpack.c.l.b16 %v107
    %v708 = vunpack.c.h.b16 %v107
    %v709 = vunpack.c.l.b16 %v108
    %v710 = vunpack.c.h.b16 %v108
    %v711 = vunpack.c.l.b16 %v109
    %v712 = vunpack.c.h.b16 %v109
    %v713 = vunpack.c.l.b16 %v110
    %v714 = vunpack.c.h.b16 %v110
    %v715 = vunpack.c.l.b16 %v111
    %v716 = vunpack.c.h.b16 %v111
    %v717 = vunpack.c.l.b16 %v112
    %v718 = vunpack.c.h.b16 %v112
    %v719 = vunpack.c.l.b16 %v113
    %v720 = vunpack.c.h.b16 %v113
    %v721 = vunpack.c.l.b16 %v114
    %v722 = vunpack.c.h.b16 %v114
    %v723 = vunpack.c.l.b16 %v115
    %v724 = vunpack.c.h.b16 %v115
    %v725 = vunpack.c.l.b16 %v116
    %v726 = vunpack.c.h.b16 %v116
    %v727 = vunpack.c.l.b16 %v117
    %v728 = vunpack.c.h.b16 %v117
    %v729 = vunpack.c.l.b16 %v118
    %v730 = vunpack.c.h.b16 %v118
    %v731 = vunpack.c.l.b16 %v119
    %v732 = vunpack.c.h.b16 %v119
    %v733 = vunpack.c.l.b16 %v120
    %v734 = vunpack.c.h.b16 %v120
    %v735 = vunpack.c.l.b16 %v121
    %v736 = vunpack.c.h.b16 %v121
    %v737 = vunpack.c.l.b16 %v122
    %v738 = vunpack.c.h.b16 %v122
    %v739 = vunpack.c.l.b16 %v123
    %v740 = vunpack.c.h.b16 %v123
    %v741 = vunpack.c.l.b16 %v124
    %v742 = vunpack.c.h.b16 %v124
    %v743 = vunpack.c.l.b16 %v125
    %v744 = vunpack.c.h.b16 %v125
    %v745 = vunpack.c.l.b16 %v126
    %v746 = vunpack.c.h.b16 %v126
    %v747 = vunpack.c.l.b16 %v127
    %v748 = vunpack.c.h.b16 %v127
    %v749 = vunpack.c.l.b16 %v128
    %v750 = vunpack.c.h.b16 %v128
    %v751 = vunpack.c.l.b16 %v129
    %v752 = vunpack.c.h.b16 %v129
    %v753 = vunpack.c.l.b16 %v130
    %v754 = vunpack.c.h.b16 %v130
    %v755 = vunpack.c.l.b16 %v131
    %v756 = vunpack.c.h.b16 %v131
    %v757 = vunpack.c.l.b16 %v132
    %v758 = vunpack.c.h.b16 %v132
    %v759 = vunpack.c.l.b16 %v133
    %v760 = vunpack.c.h.b16 %v133
    %v761 = vunpack.c.l.b16 %v134
    %v762 = vunpack.c.h.b16 %v134
    %v763 = vunpack.c.l.b16 %v135
    %v764 = vunpack.c.h.b16 %v135
    %v765 = vunpack.c.l.b16 %v136
    %v766 = vunpack.c.h.b16 %v136
    %v767 = vunpack.c.l.b16 %v137
    %v768 = vunpack.c.h.b16 %v137
    %v769 = vunpack.c.l.b16 %v138
    %v770 = vunpack.c.h.b16 %v138
    %v771 = vunpack.c.l.b16 %v139
    %v772 = vunpack.c.h.b16 %v139
    %v773 = vunpack.c.l.b16 %v140
    %v774 = vunpack.c.h.b16 %v140
    %v775 = vunpack.c.l.b16 %v141
    %v776 = vunpack.c.h.b16 %v141
    %v777 = vunpack.c.l.b16 %v142
    %v778 = vunpack.c.h.b16 %v142
    %v779 = vunpack.c.l.b16 %v143
    %v780 = vunpack.c.h.b16 %v143
    %v781 = vunpack.c.l.b16 %v144
    %v782 = vunpack.c.h.b16 %v144
    %v783 = vunpack.c.l.b16 %v145
    %v784 = vunpack.c.h.b16 %v145
    %v785 = vunpack.c.l.b16 %v146
    %v786 = vunpack.c.h.b16 %v146
    %v787 = vpack.c.b16 %v547, %v531
    %v788 = vpack.c.b16 %v548, %v532
    %v789 = vpack.c.b16 %v549, %v533
    %v790 = vpack.c.b16 %v550, %v534
    %v791 = vpack.c.b16 %v551, %v535
    %v792 = vpack.c.b16 %v552, %v536
    %v793 = vpack.c.b16 %v553, %v537
    %v794 = vpack.c.b16 %v554, %v538
    %v795 = vpack.c.b16 %v555, %v539
    %v796 = vpack.c.b16 %v556, %v540
    %v797 = vpack.c.b16 %v557, %v541
    %v798 = vpack.c.b16 %v558, %v542
    %v799 = vpack.c.b16 %v559, %v543
    %v800 = vpack.c.b16 %v560, %v544
    %v801 = vpack.c.b16 %v561, %v545
    %v802 = vpack.c.b16 %v562, %v546
    %v803 = vpack.c.b16 %v579, %v563
    %v804 = vpack.c.b16 %v580, %v564
    %v805 = vpack.c.b16 %v581, %v565
    %v806 = vpack.c.b16 %v582, %v566
    %v807 = vpack.c.b16 %v583, %v567
    %v808 = vpack.c.b16 %v584, %v568
    %v809 = vpack.c.b16 %v585, %v569
    %v810 = vpack.c.b16 %v586, %v570
    %v811 = vpack.c.b16 %v587, %v571
    %v812 = vpack.c.b16 %v588, %v572
    %v813 = vpack.c.b16 %v589, %v573
    %v814 = vpack.c.b16 %v590, %v574
    %v815 = vpack.c.b16 %v591, %v575
    %v816 = vpack.c.b16 %v592, %v576
    %v817 = vpack.c.b16 %v593, %v577
    %v818 = vpack.c.b16 %v594, %v578
    %v819 = vpack.c.b16 %v611, %v595
    %v820 = vpack.c.b16 %v612, %v596
    %v821 = vpack.c.b16 %v613, %v597
    %v822 = vpack.c.b16 %v614, %v598
    %v823 = vpack.c.b16 %v615, %v599
    %v824 = vpack.c.b16 %v616, %v600
    %v825 = vpack.c.b16 %v617, %v601
    %v826 = vpack.c.b16 %v618, %v602
    %v827 = vpack.c.b16 %v619, %v603
    %v828 = vpack.c.b16 %v620, %v604
    %v829 = vpack.c.b16 %v621, %v605
    %v830 = vpack.c.b16 %v622, %v606
    %v831 = vpack.c.b16 %v623, %v607
    %v832 = vpack.c.b16 %v624, %v608
    %v833 = vpack.c.b16 %v625, %v609
    %v834 = vpack.c.b16 %v626, %v610
    %v835 = vpack.c.b16 %v643, %v627
    %v836 = vpack.c.b16 %v644, %v628
    %v837 = vpack.c.b16 %v645, %v629
    %v838 = vpack.c.b16 %v646, %v630
    %v839 = vpack.c.b16 %v647, %v631
    %v840 = vpack.c.b16 %v648, %v632
    %v841 = vpack.c.b16 %v649, %v633
    %v842 = vpack.c.b16 %v650, %v634
    %v843 = vpack.c.b16 %v651, %v635
    %v844 = vpack.c.b16 %v652, %v636
    %v845 = vpack.c.b16 %v653, %v637
    %v846 = vpack.c.b16 %v654, %v638
    %v847 = vpack.c.b16 %v655, %v639
    %v848 = vpack.c.b16 %v656, %v640
    %v849 = vpack.c.b16 %v657, %v641
    %v850 = vpack.c.b16 %v658, %v642
    %v851 = vpack.c.b16 %v675, %v659
    %v852 = vpack.c.b16 %v676, %v660
    %v853 = vpack.c.b16 %v677, %v661
    %v854 = vpack.c.b16 %v678, %v662
    %v855 = vpack.c.b16 %v679, %v663
    %v856 = vpack.c.b16 %v680, %v664
    %v857 = vpack.c.b16 %v681, %v665
    %v858 = vpack.c.b16 %v682, %v666
    %v859 = vpack.c.b16 %v683, %v667
    %v860 = vpack.c.b16 %v684, %v668
    %v861 = vpack.c.b16 %v685, %v669
    %v862 = vpack.c.b16 %v686, %v670
    %v863 = vpack.c.b16 %v687, %v671
    %v864 = vpack.c.b16 %v688, %v672
    %v865 = vpack.c.b16 %v689, %v673
    %v866 = vpack.c.b16 %v690, %v674
    %v867 = vpack.c.b16 %v707, %v691
    %v868 = vpack.c.b16 %v708, %v692
    %v869 = vpack.c.b16 %v709, %v693
    %v870 = vpack.c.b16 %v710, %v694
    %v871 = vpack.c.b16 %v711, %v695
    %v872 = vpack.c.b16 %v712, %v696
    %v873 = vpack.c.b16 %v713, %v697
    %v874 = vpack.c.b16 %v714, %v698
    %v875 = vpack.c.b16 %v715, %v699
    %v876 = vpack.c.b16 %v716, %v700
    %v877 = vpack.c.b16 %v717, %v701
    %v878 = vpack.c.b16 %v718, %v702
    %v879 = vpack.c.b16 %v719, %v703
    %v880 = vpack.c.b16 %v720, %v704
    %v881 = vpack.c.b16 %v721, %v705
    %v882 = vpack.c.b16 %v722, %v706
    %v883 = vpack.c.b16 %v739, %v723
    %v884 = vpack.c.b16 %v740, %v724
    %v885 = vpack.c.b16 %v741, %v725
    %v886 = vpack.c.b16 %v742, %v726
    %v887 = vpack.c.b16 %v743, %v727
    %v888 = vpack.c.b16 %v744, %v728
    %v889 = vpack.c.b16 %v745, %v729
    %v890 = vpack.c.b16 %v746, %v730
    %v891 = vpack.c.b16 %v747, %v731
    %v892 = vpack.c.b16 %v748, %v732
    %v893 = vpack.c.b16 %v749, %v733
    %v894 = vpack.c.b16 %v750, %v734
    %v895 = vpack.c.b16 %v751, %v735
    %v896 = vpack.c.b16 %v752, %v736
    %v897 = vpack.c.b16 %v753, %v737
    %v898 = vpack.c.b16 %v754, %v738
    %v899 = vpack.c.b16 %v771, %v755
    %v900 = vpack.c.b16 %v772, %v756
    %v901 = vpack.c.b16 %v773, %v757
    %v902 = vpack.c.b16 %v774, %v758
    %v903 = vpack.c.b16 %v775, %v759
    %v904 = vpack.c.b16 %v776, %v760
    %v905 = vpack.c.b16 %v777, %v761
    %v906 = vpack.c.b16 %v778, %v762
    %v907 = vpack.c.b16 %v779, %v763
    %v908 = vpack.c.b16 %v780, %v764
    %v909 = vpack.c.b16 %v781, %v765
    %v910 = vpack.c.b16 %v782, %v766
    %v911 = vpack.c.b16 %v783, %v767
    %v912 = vpack.c.b16 %v784, %v768
    %v913 = vpack.c.b16 %v785, %v769
    %v914 = vpack.c.b16 %v786, %v770
    %v1299 = vunpack.c.l.b16 %v147
    %v1300 = vunpack.c.l.b16 %v148
    %v1301 = vunpack.c.l.b16 %v149
    %v1302 = vunpack.c.l.b16 %v150
    %v1303 = vunpack.c.l.b16 %v151
    %v1304 = vunpack.c.l.b16 %v152
    %v1305 = vunpack.c.l.b16 %v153
    %v1306 = vunpack.c.l.b16 %v154
    %v1307 = vunpack.c.l.b16 %v155
    %v1308 = vunpack.c.l.b16 %v156
    %v1309 = vunpack.c.l.b16 %v157
    %v1310 = vunpack.c.l.b16 %v158
    %v1311 = vunpack.c.l.b16 %v159
    %v1312 = vunpack.c.l.b16 %v160
    %v1313 = vunpack.c.l.b16 %v161
    %v1314 = vunpack.c.l.b16 %v162
    %v1315 = vunpack.c.l.b16 %v163
    %v1316 = vunpack.c.l.b16 %v164
    %v1317 = vunpack.c.l.b16 %v165
    %v1318 = vunpack.c.l.b16 %v166
    %v1319 = vunpack.c.l.b16 %v167
    %v1320 = vunpack.c.l.b16 %v168
    %v1321 = vunpack.c.l.b16 %v169
    %v1322 = vunpack.c.l.b16 %v170
    %v1323 = vunpack.c.l.b16 %v171
    %v1324 = vunpack.c.l.b16 %v172
    %v1325 = vunpack.c.l.b16 %v173
    %v1326 = vunpack.c.l.b16 %v174
    %v1327 = vunpack.c.l.b16 %v175
    %v1328 = vunpack.c.l.b16 %v176
    %v1329 = vunpack.c.l.b16 %v177
    %v1330 = vunpack.c.l.b16 %v178
    %v1331 = vunpack.c.l.b16 %v179
    %v1332 = vunpack.c.l.b16 %v180
    %v1333 = vunpack.c.l.b16 %v181
    %v1334 = vunpack.c.l.b16 %v182
    %v1335 = vunpack.c.l.b16 %v183
    %v1336 = vunpack.c.l.b16 %v184
    %v1337 = vunpack.c.l.b16 %v185
    %v1338 = vunpack.c.l.b16 %v186
    %v1339 = vunpack.c.l.b16 %v187
    %v1340 = vunpack.c.l.b16 %v188
    %v1341 = vunpack.c.l.b16 %v189
    %v1342 = vunpack.c.l.b16 %v190
    %v1343 = vunpack.c.l.b16 %v191
    %v1344 = vunpack.c.l.b16 %v192
    %v1345 = vunpack.c.l.b16 %v193
    %v1346 = vunpack.c.l.b16 %v194
    %v1347 = vunpack.c.l.b16 %v195
    %v1348 = vunpack.c.l.b16 %v196
    %v1349 = vunpack.c.l.b16 %v197
    %v1350 = vunpack.c.l.b16 %v198
    %v1351 = vunpack.c.l.b16 %v199
    %v1352 = vunpack.c.l.b16 %v200
    %v1353 = vunpack.c.l.b16 %v201
    %v1354 = vunpack.c.l.b16 %v202
    %v1355 = vunpack.c.l.b16 %v203
    %v1356 = vunpack.c.l.b16 %v204
    %v1357 = vunpack.c.l.b16 %v205
    %v1358 = vunpack.c.l.b16 %v206
    %v1359 = vunpack.c.l.b16 %v207
    %v1360 = vunpack.c.l.b16 %v208
    %v1361 = vunpack.c.l.b16 %v209
    %v1362 = vunpack.c.l.b16 %v210
    %v1363 = vunpack.c.l.b16 %v211
    %v1364 = vunpack.c.l.b16 %v212
    %v1365 = vunpack.c.l.b16 %v213
    %v1366 = vunpack.c.l.b16 %v214
    %v1367 = vunpack.c.l.b16 %v215
    %v1368 = vunpack.c.l.b16 %v216
    %v1369 = vunpack.c.l.b16 %v217
    %v1370 = vunpack.c.l.b16 %v218
    %v1371 = vunpack.c.l.b16 %v219
    %v1372 = vunpack.c.l.b16 %v220
    %v1373 = vunpack.c.l.b16 %v221
    %v1374 = vunpack.c.l.b16 %v222
    %v1375 = vunpack.c.l.b16 %v223
    %v1376 = vunpack.c.l.b16 %v224
    %v1377 = vunpack.c.l.b16 %v225
    %v1378 = vunpack.c.l.b16 %v226
    %v1379 = vunpack.c.l.b16 %v227
    %v1380 = vunpack.c.l.b16 %v228
    %v1381 = vunpack.c.l.b16 %v229
    %v1382 = vunpack.c.l.b16 %v230
    %v1383 = vunpack.c.l.b16 %v231
    %v1384 = vunpack.c.l.b16 %v232
    %v1385 = vunpack.c.l.b16 %v233
    %v1386 = vunpack.c.l.b16 %v234
    %v1387 = vunpack.c.l.b16 %v235
    %v1388 = vunpack.c.l.b16 %v236
    %v1389 = vunpack.c.l.b16 %v237
    %v1390 = vunpack.c.l.b16 %v238
    %v1391 = vunpack.c.l.b16 %v239
    %v1392 = vunpack.c.l.b16 %v240
    %v1393 = vunpack.c.l.b16 %v241
    %v1394 = vunpack.c.l.b16 %v242
    %v1395 = vunpack.c.l.b16 %v243
    %v1396 = vunpack.c.l.b16 %v244
    %v1397 = vunpack.c.l.b16 %v245
    %v1398 = vunpack.c.l.b16 %v246
    %v1399 = vunpack.c.l.b16 %v247
    %v1400 = vunpack.c.l.b16 %v248
    %v1401 = vunpack.c.l.b16 %v249
    %v1402 = vunpack.c.l.b16 %v250
    %v1403 = vunpack.c.l.b16 %v251
    %v1404 = vunpack.c.l.b16 %v252
    %v1405 = vunpack.c.l.b16 %v253
    %v1406 = vunpack.c.l.b16 %v254
    %v1407 = vunpack.c.l.b16 %v255
    %v1408 = vunpack.c.l.b16 %v256
    %v1409 = vunpack.c.l.b16 %v257
    %v1410 = vunpack.c.l.b16 %v258
    %v1411 = vunpack.c.l.b16 %v259
    %v1412 = vunpack.c.l.b16 %v260
    %v1413 = vunpack.c.l.b16 %v261
    %v1414 = vunpack.c.l.b16 %v262
    %v1415 = vunpack.c.l.b16 %v263
    %v1416 = vunpack.c.l.b16 %v264
    %v1417 = vunpack.c.l.b16 %v265
    %v1418 = vunpack.c.l.b16 %v266
    %v1419 = vunpack.c.l.b16 %v267
    %v1420 = vunpack.c.l.b16 %v268
    %v1421 = vunpack.c.l.b16 %v269
    %v1422 = vunpack.c.l.b16 %v270
    %v1423 = vunpack.c.l.b16 %v271
    %v1424 = vunpack.c.l.b16 %v272
    %v1425 = vunpack.c.l.b16 %v273
    %v1426 = vunpack.c.l.b16 %v274
    %v1427 = vunpack.c.l.b16 %v275
    %v1428 = vunpack.c.l.b16 %v276
    %v1429 = vunpack.c.l.b16 %v277
    %v1430 = vunpack.c.l.b16 %v278
    %v1431 = vunpack.c.l.b16 %v279
    %v1432 = vunpack.c.l.b16 %v280
    %v1433 = vunpack.c.l.b16 %v281
    %v1434 = vunpack.c.l.b16 %v282
    %v1435 = vunpack.c.l.b16 %v283
    %v1436 = vunpack.c.l.b16 %v284
    %v1437 = vunpack.c.l.b16 %v285
    %v1438 = vunpack.c.l.b16 %v286
    %v1439 = vunpack.c.l.b16 %v287
    %v1440 = vunpack.c.l.b16 %v288
    %v1441 = vunpack.c.l.b16 %v289
    %v1442 = vunpack.c.l.b16 %v290
    %v1443 = vunpack.c.l.b16 %v291
    %v1444 = vunpack.c.l.b16 %v292
    %v1445 = vunpack.c.l.b16 %v293
    %v1446 = vunpack.c.l.b16 %v294
    %v1447 = vunpack.c.l.b16 %v295
    %v1448 = vunpack.c.l.b16 %v296
    %v1449 = vunpack.c.l.b16 %v297
    %v1450 = vunpack.c.l.b16 %v298
    %v1451 = vunpack.c.l.b16 %v299
    %v1452 = vunpack.c.l.b16 %v300
    %v1453 = vunpack.c.l.b16 %v301
    %v1454 = vunpack.c.l.b16 %v302
    %v1455 = vunpack.c.l.b16 %v303
    %v1456 = vunpack.c.l.b16 %v304
    %v1457 = vunpack.c.l.b16 %v305
    %v1458 = vunpack.c.l.b16 %v306
    %v1459 = vunpack.c.l.b16 %v307
    %v1460 = vunpack.c.l.b16 %v308
    %v1461 = vunpack.c.l.b16 %v309
    %v1462 = vunpack.c.l.b16 %v310
    %v1463 = vunpack.c.l.b16 %v311
    %v1464 = vunpack.c.l.b16 %v312
    %v1465 = vunpack.c.l.b16 %v313
    %v1466 = vunpack.c.l.b16 %v314
    %v1467 = vunpack.c.l.b16 %v315
    %v1468 = vunpack.c.l.b16 %v316
    %v1469 = vunpack.c.l.b16 %v317
    %v1470 = vunpack.c.l.b16 %v318
    %v1471 = vunpack.c.l.b16 %v319
    %v1472 = vunpack.c.l.b16 %v320
    %v1473 = vunpack.c.l.b16 %v321
    %v1474 = vunpack.c.l.b16 %v322
    %v1475 = vunpack.c.l.b16 %v323
    %v1476 = vunpack.c.l.b16 %v324
    %v1477 = vunpack.c.l.b16 %v325
    %v1478 = vunpack.c.l.b16 %v326
    %v1479 = vunpack.c.l.b16 %v327
    %v1480 = vunpack.c.l.b16 %v328
    %v1481 = vunpack.c.l.b16 %v329
    %v1482 = vunpack.c.l.b16 %v330
    %v1483 = vunpack.c.l.b16 %v331
    %v1484 = vunpack.c.l.b16 %v332
    %v1485 = vunpack.c.l.b16 %v333
    %v1486 = vunpack.c.l.b16 %v334
    %v1487 = vunpack.c.l.b16 %v335
    %v1488 = vunpack.c.l.b16 %v336
    %v1489 = vunpack.c.l.b16 %v337
    %v1490 = vunpack.c.l.b16 %v338
    %v1491 = vunpack.c.l.b16 %v339
    %v1492 = vunpack.c.l.b16 %v340
    %v1493 = vunpack.c.l.b16 %v341
    %v1494 = vunpack.c.l.b16 %v342
    %v1495 = vunpack.c.l.b16 %v343
    %v1496 = vunpack.c.l.b16 %v344
    %v1497 = vunpack.c.l.b16 %v345
    %v1498 = vunpack.c.l.b16 %v346
    %v1499 = vunpack.c.l.b16 %v347
    %v1500 = vunpack.c.l.b16 %v348
    %v1501 = vunpack.c.l.b16 %v349
    %v1502 = vunpack.c.l.b16 %v350
    %v1503 = vunpack.c.l.b16 %v351
    %v1504 = vunpack.c.l.b16 %v352
    %v1505 = vunpack.c.l.b16 %v353
    %v1506 = vunpack.c.l.b16 %v354
    %v1507 = vunpack.c.l.b16 %v355
    %v1508 = vunpack.c.l.b16 %v356
    %v1509 = vunpack.c.l.b16 %v357
    %v1510 = vunpack.c.l.b16 %v358
    %v1511 = vunpack.c.l.b16 %v359
    %v1512 = vunpack.c.l.b16 %v360
    %v1513 = vunpack.c.l.b16 %v361
    %v1514 = vunpack.c.l.b16 %v362
    %v1515 = vunpack.c.l.b16 %v363
    %v1516 = vunpack.c.l.b16 %v364
    %v1517 = vunpack.c.l.b16 %v365
    %v1518 = vunpack.c.l.b16 %v366
    %v1519 = vunpack.c.l.b16 %v367
    %v1520 = vunpack.c.l.b16 %v368
    %v1521 = vunpack.c.l.b16 %v369
    %v1522 = vunpack.c.l.b16 %v370
    %v1523 = vunpack.c.l.b16 %v371
    %v1524 = vunpack.c.l.b16 %v372
    %v1525 = vunpack.c.l.b16 %v373
    %v1526 = vunpack.c.l.b16 %v374
    %v1527 = vunpack.c.l.b16 %v375
    %v1528 = vunpack.c.l.b16 %v376
    %v1529 = vunpack.c.l.b16 %v377
    %v1530 = vunpack.c.l.b16 %v378
    %v1531 = vunpack.c.l.b16 %v379
    %v1532 = vunpack.c.l.b16 %v380
    %v1533 = vunpack.c.l.b16 %v381
    %v1534 = vunpack.c.l.b16 %v382
    %v1535 = vunpack.c.l.b16 %v383
    %v1536 = vunpack.c.l.b16 %v384
    %v1537 = vunpack.c.l.b16 %v385
    %v1538 = vunpack.c.l.b16 %v386
    %v1539 = vunpack.c.l.b16 %v387
    %v1540 = vunpack.c.l.b16 %v388
    %v1541 = vunpack.c.l.b16 %v389
    %v1542 = vunpack.c.l.b16 %v390
    %v1543 = vunpack.c.l.b16 %v391
    %v1544 = vunpack.c.l.b16 %v392
    %v1545 = vunpack.c.l.b16 %v393
    %v1546 = vunpack.c.l.b16 %v394
    %v1547 = vunpack.c.l.b16 %v395
    %v1548 = vunpack.c.l.b16 %v396
    %v1549 = vunpack.c.l.b16 %v397
    %v1550 = vunpack.c.l.b16 %v398
    %v1551 = vunpack.c.l.b16 %v399
    %v1552 = vunpack.c.l.b16 %v400
    %v1553 = vunpack.c.l.b16 %v401
    %v1554 = vunpack.c.l.b16 %v402
    %v1555 = vpack.c.b16 %v1300, %v1299
    %v1556 = vpack.c.b16 %v1302, %v1301
    %v1557 = vpack.c.b16 %v1304, %v1303
    %v1558 = vpack.c.b16 %v1306, %v1305
    %v1559 = vpack.c.b16 %v1308, %v1307
    %v1560 = vpack.c.b16 %v1310, %v1309
    %v1561 = vpack.c.b16 %v1312, %v1311
    %v1562 = vpack.c.b16 %v1314, %v1313
    %v1563 = vpack.c.b16 %v1316, %v1315
    %v1564 = vpack.c.b16 %v1318, %v1317
    %v1565 = vpack.c.b16 %v1320, %v1319
    %v1566 = vpack.c.b16 %v1322, %v1321
    %v1567 = vpack.c.b16 %v1324, %v1323
    %v1568 = vpack.c.b16 %v1326, %v1325
    %v1569 = vpack.c.b16 %v1328, %v1327
    %v1570 = vpack.c.b16 %v1330, %v1329
    %v1571 = vpack.c.b16 %v1332, %v1331
    %v1572 = vpack.c.b16 %v1334, %v1333
    %v1573 = vpack.c.b16 %v1336, %v1335
    %v1574 = vpack.c.b16 %v1338, %v1337
    %v1575 = vpack.c.b16 %v1340, %v1339
    %v1576 = vpack.c.b16 %v1342, %v1341
    %v1577 = vpack.c.b16 %v1344, %v1343
    %v1578 = vpack.c.b16 %v1346, %v1345
    %v1579 = vpack.c.b16 %v1348, %v1347
    %v1580 = vpack.c.b16 %v1350, %v1349
    %v1581 = vpack.c.b16 %v1352, %v1351
    %v1582 = vpack.c.b16 %v1354, %v1353
    %v1583 = vpack.c.b16 %v1356, %v1355
    %v1584 = vpack.c.b16 %v1358, %v1357
    %v1585 = vpack.c.b16 %v1360, %v1359
    %v1586 = vpack.c.b16 %v1362, %v1361
    %v1587 = vpack.c.b16 %v1364, %v1363
    %v1588 = vpack.c.b16 %v1366, %v1365
    %v1589 = vpack.c.b16 %v1368, %v1367
    %v1590 = vpack.c.b16 %v1370, %v1369
    %v1591 = vpack.c.b16 %v1372, %v1371
    %v1592 = vpack.c.b16 %v1374, %v1373
    %v1593 = vpack.c.b16 %v1376, %v1375
    %v1594 = vpack.c.b16 %v1378, %v1377
    %v1595 = vpack.c.b16 %v1380, %v1379
    %v1596 = vpack.c.b16 %v1382, %v1381
    %v1597 = vpack.c.b16 %v1384, %v1383
    %v1598 = vpack.c.b16 %v1386, %v1385
    %v1599 = vpack.c.b16 %v1388, %v1387
    %v1600 = vpack.c.b16 %v1390, %v1389
    %v1601 = vpack.c.b16 %v1392, %v1391
    %v1602 = vpack.c.b16 %v1394, %v1393
    %v1603 = vpack.c.b16 %v1396, %v1395
    %v1604 = vpack.c.b16 %v1398, %v1397
    %v1605 = vpack.c.b16 %v1400, %v1399
    %v1606 = vpack.c.b16 %v1402, %v1401
    %v1607 = vpack.c.b16 %v1404, %v1403
    %v1608 = vpack.c.b16 %v1406, %v1405
    %v1609 = vpack.c.b16 %v1408, %v1407
    %v1610 = vpack.c.b16 %v1410, %v1409
    %v1611 = vpack.c.b16 %v1412, %v1411
    %v1612 = vpack.c.b16 %v1414, %v1413
    %v1613 = vpack.c.b16 %v1416, %v1415
    %v1614 = vpack.c.b16 %v1418, %v1417
    %v1615 = vpack.c.b16 %v1420, %v1419
    %v1616 = vpack.c.b16 %v1422, %v1421
    %v1617 = vpack.c.b16 %v1424, %v1423
    %v1618 = vpack.c.b16 %v1426, %v1425
    %v1619 = vpack.c.b16 %v1428, %v1427
    %v1620 = vpack.c.b16 %v1430, %v1429
    %v1621 = vpack.c.b16 %v1432, %v1431
    %v1622 = vpack.c.b16 %v1434, %v1433
    %v1623 = vpack.c.b16 %v1436, %v1435
    %v1624 = vpack.c.b16 %v1438, %v1437
    %v1625 = vpack.c.b16 %v1440, %v1439
    %v1626 = vpack.c.b16 %v1442, %v1441
    %v1627 = vpack.c.b16 %v1444, %v1443
    %v1628 = vpack.c.b16 %v1446, %v1445
    %v1629 = vpack.c.b16 %v1448, %v1447
    %v1630 = vpack.c.b16 %v1450, %v1449
    %v1631 = vpack.c.b16 %v1452, %v1451
    %v1632 = vpack.c.b16 %v1454, %v1453
    %v1633 = vpack.c.b16 %v1456, %v1455
    %v1634 = vpack.c.b16 %v1458, %v1457
    %v1635 = vpack.c.b16 %v1460, %v1459
    %v1636 = vpack.c.b16 %v1462, %v1461
    %v1637 = vpack.c.b16 %v1464, %v1463
    %v1638 = vpack.c.b16 %v1466, %v1465
    %v1639 = vpack.c.b16 %v1468, %v1467
    %v1640 = vpack.c.b16 %v1470, %v1469
    %v1641 = vpack.c.b16 %v1472, %v1471
    %v1642 = vpack.c.b16 %v1474, %v1473
    %v1643 = vpack.c.b16 %v1476, %v1475
    %v1644 = vpack.c.b16 %v1478, %v1477
    %v1645 = vpack.c.b16 %v1480, %v1479
    %v1646 = vpack.c.b16 %v1482, %v1481
    %v1647 = vpack.c.b16 %v1484, %v1483
    %v1648 = vpack.c.b16 %v1486, %v1485
    %v1649 = vpack.c.b16 %v1488, %v1487
    %v1650 = vpack.c.b16 %v1490, %v1489
    %v1651 = vpack.c.b16 %v1492, %v1491
    %v1652 = vpack.c.b16 %v1494, %v1493
    %v1653 = vpack.c.b16 %v1496, %v1495
    %v1654 = vpack.c.b16 %v1498, %v1497
    %v1655 = vpack.c.b16 %v1500, %v1499
    %v1656 = vpack.c.b16 %v1502, %v1501
    %v1657 = vpack.c.b16 %v1504, %v1503
    %v1658 = vpack.c.b16 %v1506, %v1505
    %v1659 = vpack.c.b16 %v1508, %v1507
    %v1660 = vpack.c.b16 %v1510, %v1509
    %v1661 = vpack.c.b16 %v1512, %v1511
    %v1662 = vpack.c.b16 %v1514, %v1513
    %v1663 = vpack.c.b16 %v1516, %v1515
    %v1664 = vpack.c.b16 %v1518, %v1517
    %v1665 = vpack.c.b16 %v1520, %v1519
    %v1666 = vpack.c.b16 %v1522, %v1521
    %v1667 = vpack.c.b16 %v1524, %v1523
    %v1668 = vpack.c.b16 %v1526, %v1525
    %v1669 = vpack.c.b16 %v1528, %v1527
    %v1670 = vpack.c.b16 %v1530, %v1529
    %v1671 = vpack.c.b16 %v1532, %v1531
    %v1672 = vpack.c.b16 %v1534, %v1533
    %v1673 = vpack.c.b16 %v1536, %v1535
    %v1674 = vpack.c.b16 %v1538, %v1537
    %v1675 = vpack.c.b16 %v1540, %v1539
    %v1676 = vpack.c.b16 %v1542, %v1541
    %v1677 = vpack.c.b16 %v1544, %v1543
    %v1678 = vpack.c.b16 %v1546, %v1545
    %v1679 = vpack.c.b16 %v1548, %v1547
    %v1680 = vpack.c.b16 %v1550, %v1549
    %v1681 = vpack.c.b16 %v1552, %v1551
    %v1682 = vpack.c.b16 %v1554, %v1553
    %1811 = vmatprep.subr.bf16.mxu0 0
    %1812 = vmatpush1.bf16.msra.mxu0 %v1555
    %1813 = vmatprep.subr.bf16.mxu0 0
    %1814 = vmatpush1.bf16.msra.mxu0 %v1556
    %1815 = vmatprep.subr.bf16.mxu0 0
    %1816 = vmatpush1.bf16.msra.mxu0 %v1557
    %1817 = vmatprep.subr.bf16.mxu0 0
    %1818 = vmatpush1.bf16.msra.mxu0 %v1558
    %1819 = vmatprep.subr.bf16.mxu0 0
    %1820 = vmatpush1.bf16.msra.mxu0 %v1559
    %1821 = vmatprep.subr.bf16.mxu0 0
    %1822 = vmatpush1.bf16.msra.mxu0 %v1560
    %1823 = vmatprep.subr.bf16.mxu0 0
    %1824 = vmatpush1.bf16.msra.mxu0 %v1561
    %1825 = vmatprep.subr.bf16.mxu0 0
    %1826 = vmatpush1.bf16.msra.mxu0 %v1562
    %1827 = vmatprep.subr.bf16.mxu0 0
    %1828 = vmatpush1.bf16.msra.mxu0 %v1563
    %1829 = vmatprep.subr.bf16.mxu0 0
    %1830 = vmatpush1.bf16.msra.mxu0 %v1564
    %1831 = vmatprep.subr.bf16.mxu0 0
    %1832 = vmatpush1.bf16.msra.mxu0 %v1565
    %1833 = vmatprep.subr.bf16.mxu0 0
    %1834 = vmatpush1.bf16.msra.mxu0 %v1566
    %1835 = vmatprep.subr.bf16.mxu0 0
    %1836 = vmatpush1.bf16.msra.mxu0 %v1567
    %1837 = vmatprep.subr.bf16.mxu0 0
    %1838 = vmatpush1.bf16.msra.mxu0 %v1568
    %1839 = vmatprep.subr.bf16.mxu0 0
    %1840 = vmatpush1.bf16.msra.mxu0 %v1569
    %1841 = vmatprep.subr.bf16.mxu0 0
    %1842 = vmatpush1.bf16.msra.mxu0 %v1570
    %1843 = vmatprep.mubr.bf16.mxu0 %v788
    %1844 = vmatmul.mubr.bf16.gmra.mrb[0].mxu0 %v787
    %v1845 = vpop.f32.mrb[0].mxu0
    %v1846 = vadd.f32 0.0, %v1845
    %v1847 = vpop.f32.mrb[0].mxu0
    %v1848 = vpop.f32.mrb[0].mxu0
    %v1849 = vadd.f32 0.0, %v1848
    %v1850 = vpop.f32.mrb[0].mxu0
    %1851 = vmatprep.mubr.bf16.mxu0 %v804
    %1852 = vmatmul.mubr.bf16.gmra.mrb[0].mxu0 %v803
    %v1853 = vpop.f32.mrb[0].mxu0
    %v1854 = vadd.f32 0.0, %v1853
    %v1855 = vpop.f32.mrb[0].mxu0
    %v1856 = vpop.f32.mrb[0].mxu0
    %v1857 = vadd.f32 0.0, %v1856
    %v1858 = vpop.f32.mrb[0].mxu0
    %1859 = vmatprep.mubr.bf16.mxu0 %v820
    %1860 = vmatmul.mubr.bf16.gmra.mrb[0].mxu0 %v819
    %v1861 = vpop.f32.mrb[0].mxu0
    %v1862 = vadd.f32 0.0, %v1861
    %v1863 = vpop.f32.mrb[0].mxu0
    %v1864 = vpop.f32.mrb[0].mxu0
    %v1865 = vadd.f32 0.0, %v1864
    %v1866 = vpop.f32.mrb[0].mxu0
    %1867 = vmatprep.mubr.bf16.mxu0 %v836
    %1868 = vmatmul.mubr.bf16.gmra.mrb[0].mxu0 %v835
    %v1869 = vpop.f32.mrb[0].mxu0
    %v1870 = vadd.f32 0.0, %v1869
    %v1871 = vpop.f32.mrb[0].mxu0
    %v1872 = vpop.f32.mrb[0].mxu0
    %v1873 = vadd.f32 0.0, %v1872
    %v1874 = vpop.f32.mrb[0].mxu0
    %1875 = vmatprep.mubr.bf16.mxu0 %v852
    %1876 = vmatmul.mubr.bf16.gmra.mrb[0].mxu0 %v851
    %v1877 = vpop.f32.mrb[0].mxu0
    %v1878 = vadd.f32 0.0, %v1877
    %v1879 = vpop.f32.mrb[0].mxu0
    %v1880 = vpop.f32.mrb[0].mxu0
    %v1881 = vadd.f32 0.0, %v1880
    %v1882 = vpop.f32.mrb[0].mxu0
    %1883 = vmatprep.mubr.bf16.mxu0 %v868
    %1884 = vmatmul.mubr.bf16.gmra.mrb[0].mxu0 %v867
    %v1885 = vpop.f32.mrb[0].mxu0
    %v1886 = vadd.f32 0.0, %v1885
    %v1887 = vpop.f32.mrb[0].mxu0
    %v1888 = vpop.f32.mrb[0].mxu0
    %v1889 = vadd.f32 0.0, %v1888
    %v1890 = vpop.f32.mrb[0].mxu0
    %1891 = vmatprep.mubr.bf16.mxu0 %v884
    %1892 = vmatmul.mubr.bf16.gmra.mrb[0].mxu0 %v883
    %v1893 = vpop.f32.mrb[0].mxu0
    %v1894 = vadd.f32 0.0, %v1893
    %v1895 = vpop.f32.mrb[0].mxu0
    %v1896 = vpop.f32.mrb[0].mxu0
    %v1897 = vadd.f32 0.0, %v1896
    %v1898 = vpop.f32.mrb[0].mxu0
    %1899 = vmatprep.mubr.bf16.mxu0 %v900
    %1900 = vmatmul.mubr.bf16.gmra.mrb[0].mxu0 %v899
    %v1901 = vpop.f32.mrb[0].mxu0
    %v1902 = vadd.f32 0.0, %v1901
    %v1903 = vpop.f32.mrb[0].mxu0
    %v1904 = vpop.f32.mrb[0].mxu0
    %v1905 = vadd.f32 0.0, %v1904
    %v1906 = vpop.f32.mrb[0].mxu0
    %1907 = vdwg.mxu0
    %1908 = vmatprep.subr.bf16.mxu0 0
    %1909 = vmatpush1.bf16.msra.mxu0 %v1571
    %1910 = vmatprep.subr.bf16.mxu0 0
    %1911 = vmatpush1.bf16.msra.mxu0 %v1572
    %1912 = vmatprep.subr.bf16.mxu0 0
    %1913 = vmatpush1.bf16.msra.mxu0 %v1573
    %1914 = vmatprep.subr.bf16.mxu0 0
    %1915 = vmatpush1.bf16.msra.mxu0 %v1574
    %1916 = vmatprep.subr.bf16.mxu0 0
    %1917 = vmatpush1.bf16.msra.mxu0 %v1575
    %1918 = vmatprep.subr.bf16.mxu0 0
    %1919 = vmatpush1.bf16.msra.mxu0 %v1576
    %1920 = vmatprep.subr.bf16.mxu0 0
    %1921 = vmatpush1.bf16.msra.mxu0 %v1577
    %1922 = vmatprep.subr.bf16.mxu0 0
    %1923 = vmatpush1.bf16.msra.mxu0 %v1578
    %1924 = vmatprep.subr.bf16.mxu0 0
    %1925 = vmatpush1.bf16.msra.mxu0 %v1579
    %1926 = vmatprep.subr.bf16.mxu0 0
    %1927 = vmatpush1.bf16.msra.mxu0 %v1580
    %1928 = vmatprep.subr.bf16.mxu0 0
    %1929 = vmatpush1.bf16.msra.mxu0 %v1581
    %1930 = vmatprep.subr.bf16.mxu0 0
    %1931 = vmatpush1.bf16.msra.mxu0 %v1582
    %1932 = vmatprep.subr.bf16.mxu0 0
    %1933 = vmatpush1.bf16.msra.mxu0 %v1583
    %1934 = vmatprep.subr.bf16.mxu0 0
    %1935 = vmatpush1.bf16.msra.mxu0 %v1584
    %1936 = vmatprep.subr.bf16.mxu0 0
    %1937 = vmatpush1.bf16.msra.mxu0 %v1585
    %1938 = vmatprep.subr.bf16.mxu0 0
    %1939 = vmatpush1.bf16.msra.mxu0 %v1586
    %1940 = vmatprep.mubr.bf16.mxu0 %v790
    %1941 = vmatmul.mubr.bf16.gmra.mrb[0].mxu0 %v789
    %v1942 = vpop.f32.mrb[0].mxu0
    %v1943 = vadd.f32 %v1846, %v1942
    %v1944 = vpop.f32.mrb[0].mxu0
    %v1945 = vpop.f32.mrb[0].mxu0
    %v1946 = vadd.f32 %v1849, %v1945
    %v1947 = vpop.f32.mrb[0].mxu0
    %1948 = vmatprep.mubr.bf16.mxu0 %v806
    %1949 = vmatmul.mubr.bf16.gmra.mrb[0].mxu0 %v805
    %v1950 = vpop.f32.mrb[0].mxu0
    %v1951 = vadd.f32 %v1854, %v1950
    %v1952 = vpop.f32.mrb[0].mxu0
    %v1953 = vpop.f32.mrb[0].mxu0
    %v1954 = vadd.f32 %v1857, %v1953
    %v1955 = vpop.f32.mrb[0].mxu0
    %1956 = vmatprep.mubr.bf16.mxu0 %v822
    %1957 = vmatmul.mubr.bf16.gmra.mrb[0].mxu0 %v821
    %v1958 = vpop.f32.mrb[0].mxu0
    %v1959 = vadd.f32 %v1862, %v1958
    %v1960 = vpop.f32.mrb[0].mxu0
    %v1961 = vpop.f32.mrb[0].mxu0
    %v1962 = vadd.f32 %v1865, %v1961
    %v1963 = vpop.f32.mrb[0].mxu0
    %1964 = vmatprep.mubr.bf16.mxu0 %v838
    %1965 = vmatmul.mubr.bf16.gmra.mrb[0].mxu0 %v837
    %v1966 = vpop.f32.mrb[0].mxu0
    %v1967 = vadd.f32 %v1870, %v1966
    %v1968 = vpop.f32.mrb[0].mxu0
    %v1969 = vpop.f32.mrb[0].mxu0
    %v1970 = vadd.f32 %v1873, %v1969
    %v1971 = vpop.f32.mrb[0].mxu0
    %1972 = vmatprep.mubr.bf16.mxu0 %v854
    %1973 = vmatmul.mubr.bf16.gmra.mrb[0].mxu0 %v853
    %v1974 = vpop.f32.mrb[0].mxu0
    %v1975 = vadd.f32 %v1878, %v1974
    %v1976 = vpop.f32.mrb[0].mxu0
    %v1977 = vpop.f32.mrb[0].mxu0
    %v1978 = vadd.f32 %v1881, %v1977
    %v1979 = vpop.f32.mrb[0].mxu0
    %1980 = vmatprep.mubr.bf16.mxu0 %v870
    %1981 = vmatmul.mubr.bf16.gmra.mrb[0].mxu0 %v869
    %v1982 = vpop.f32.mrb[0].mxu0
    %v1983 = vadd.f32 %v1886, %v1982
    %v1984 = vpop.f32.mrb[0].mxu0
    %v1985 = vpop.f32.mrb[0].mxu0
    %v1986 = vadd.f32 %v1889, %v1985
    %v1987 = vpop.f32.mrb[0].mxu0
    %1988 = vmatprep.mubr.bf16.mxu0 %v886
    %1989 = vmatmul.mubr.bf16.gmra.mrb[0].mxu0 %v885
    %v1990 = vpop.f32.mrb[0].mxu0
    %v1991 = vadd.f32 %v1894, %v1990
    %v1992 = vpop.f32.mrb[0].mxu0
    %v1993 = vpop.f32.mrb[0].mxu0
    %v1994 = vadd.f32 %v1897, %v1993
    %v1995 = vpop.f32.mrb[0].mxu0
    %1996 = vmatprep.mubr.bf16.mxu0 %v902
    %1997 = vmatmul.mubr.bf16.gmra.mrb[0].mxu0 %v901
    %v1998 = vpop.f32.mrb[0].mxu0
    %v1999 = vadd.f32 %v1902, %v1998
    %v2000 = vpop.f32.mrb[0].mxu0
    %v2001 = vpop.f32.mrb[0].mxu0
    %v2002 = vadd.f32 %v1905, %v2001
    %v2003 = vpop.f32.mrb[0].mxu0
    %2004 = vdwg.mxu0
    %2005 = vmatprep.subr.bf16.mxu0 0
    %2006 = vmatpush1.bf16.msra.mxu0 %v1587
    %2007 = vmatprep.subr.bf16.mxu0 0
    %2008 = vmatpush1.bf16.msra.mxu0 %v1588
    %2009 = vmatprep.subr.bf16.mxu0 0
    %2010 = vmatpush1.bf16.msra.mxu0 %v1589
    %2011 = vmatprep.subr.bf16.mxu0 0
    %2012 = vmatpush1.bf16.msra.mxu0 %v1590
    %2013 = vmatprep.subr.bf16.mxu0 0
    %2014 = vmatpush1.bf16.msra.mxu0 %v1591
    %2015 = vmatprep.subr.bf16.mxu0 0
    %2016 = vmatpush1.bf16.msra.mxu0 %v1592
    %2017 = vmatprep.subr.bf16.mxu0 0
    %2018 = vmatpush1.bf16.msra.mxu0 %v1593
    %2019 = vmatprep.subr.bf16.mxu0 0
    %2020 = vmatpush1.bf16.msra.mxu0 %v1594
    %2021 = vmatprep.subr.bf16.mxu0 0
    %2022 = vmatpush1.bf16.msra.mxu0 %v1595
    %2023 = vmatprep.subr.bf16.mxu0 0
    %2024 = vmatpush1.bf16.msra.mxu0 %v1596
    %2025 = vmatprep.subr.bf16.mxu0 0
    %2026 = vmatpush1.bf16.msra.mxu0 %v1597
    %2027 = vmatprep.subr.bf16.mxu0 0
    %2028 = vmatpush1.bf16.msra.mxu0 %v1598
    %2029 = vmatprep.subr.bf16.mxu0 0
    %2030 = vmatpush1.bf16.msra.mxu0 %v1599
    %2031 = vmatprep.subr.bf16.mxu0 0
    %2032 = vmatpush1.bf16.msra.mxu0 %v1600
    %2033 = vmatprep.subr.bf16.mxu0 0
    %2034 = vmatpush1.bf16.msra.mxu0 %v1601
    %2035 = vmatprep.subr.bf16.mxu0 0
    %2036 = vmatpush1.bf16.msra.mxu0 %v1602
    %2037 = vmatprep.mubr.bf16.mxu0 %v792
    %2038 = vmatmul.mubr.bf16.gmra.mrb[0].mxu0 %v791
    %v2039 = vpop.f32.mrb[0].mxu0
    %v2040 = vadd.f32 %v1943, %v2039
    %v2041 = vpop.f32.mrb[0].mxu0
    %v2042 = vpop.f32.mrb[0].mxu0
    %v2043 = vadd.f32 %v1946, %v2042
    %v2044 = vpop.f32.mrb[0].mxu0
    %2045 = vmatprep.mubr.bf16.mxu0 %v808
    %2046 = vmatmul.mubr.bf16.gmra.mrb[0].mxu0 %v807
    %v2047 = vpop.f32.mrb[0].mxu0
    %v2048 = vadd.f32 %v1951, %v2047
    %v2049 = vpop.f32.mrb[0].mxu0
    %v2050 = vpop.f32.mrb[0].mxu0
    %v2051 = vadd.f32 %v1954, %v2050
    %v2052 = vpop.f32.mrb[0].mxu0
    %2053 = vmatprep.mubr.bf16.mxu0 %v824
    %2054 = vmatmul.mubr.bf16.gmra.mrb[0].mxu0 %v823
    %v2055 = vpop.f32.mrb[0].mxu0
    %v2056 = vadd.f32 %v1959, %v2055
    %v2057 = vpop.f32.mrb[0].mxu0
    %v2058 = vpop.f32.mrb[0].mxu0
    %v2059 = vadd.f32 %v1962, %v2058
    %v2060 = vpop.f32.mrb[0].mxu0
    %2061 = vmatprep.mubr.bf16.mxu0 %v840
    %2062 = vmatmul.mubr.bf16.gmra.mrb[0].mxu0 %v839
    %v2063 = vpop.f32.mrb[0].mxu0
    %v2064 = vadd.f32 %v1967, %v2063
    %v2065 = vpop.f32.mrb[0].mxu0
    %v2066 = vpop.f32.mrb[0].mxu0
    %v2067 = vadd.f32 %v1970, %v2066
    %v2068 = vpop.f32.mrb[0].mxu0
    %2069 = vmatprep.mubr.bf16.mxu0 %v856
    %2070 = vmatmul.mubr.bf16.gmra.mrb[0].mxu0 %v855
    %v2071 = vpop.f32.mrb[0].mxu0
    %v2072 = vadd.f32 %v1975, %v2071
    %v2073 = vpop.f32.mrb[0].mxu0
    %v2074 = vpop.f32.mrb[0].mxu0
    %v2075 = vadd.f32 %v1978, %v2074
    %v2076 = vpop.f32.mrb[0].mxu0
    %2077 = vmatprep.mubr.bf16.mxu0 %v872
    %2078 = vmatmul.mubr.bf16.gmra.mrb[0].mxu0 %v871
    %v2079 = vpop.f32.mrb[0].mxu0
    %v2080 = vadd.f32 %v1983, %v2079
    %v2081 = vpop.f32.mrb[0].mxu0
    %v2082 = vpop.f32.mrb[0].mxu0
    %v2083 = vadd.f32 %v1986, %v2082
    %v2084 = vpop.f32.mrb[0].mxu0
    %2085 = vmatprep.mubr.bf16.mxu0 %v888
    %2086 = vmatmul.mubr.bf16.gmra.mrb[0].mxu0 %v887
    %v2087 = vpop.f32.mrb[0].mxu0
    %v2088 = vadd.f32 %v1991, %v2087
    %v2089 = vpop.f32.mrb[0].mxu0
    %v2090 = vpop.f32.mrb[0].mxu0
    %v2091 = vadd.f32 %v1994, %v2090
    %v2092 = vpop.f32.mrb[0].mxu0
    %2093 = vmatprep.mubr.bf16.mxu0 %v904
    %2094 = vmatmul.mubr.bf16.gmra.mrb[0].mxu0 %v903
    %v2095 = vpop.f32.mrb[0].mxu0
    %v2096 = vadd.f32 %v1999, %v2095
    %v2097 = vpop.f32.mrb[0].mxu0
    %v2098 = vpop.f32.mrb[0].mxu0
    %v2099 = vadd.f32 %v2002, %v2098
    %v2100 = vpop.f32.mrb[0].mxu0
    %2101 = vdwg.mxu0
    %2102 = vmatprep.subr.bf16.mxu0 0
    %2103 = vmatpush1.bf16.msra.mxu0 %v1603
    %2104 = vmatprep.subr.bf16.mxu0 0
    %2105 = vmatpush1.bf16.msra.mxu0 %v1604
    %2106 = vmatprep.subr.bf16.mxu0 0
    %2107 = vmatpush1.bf16.msra.mxu0 %v1605
    %2108 = vmatprep.subr.bf16.mxu0 0
    %2109 = vmatpush1.bf16.msra.mxu0 %v1606
    %2110 = vmatprep.subr.bf16.mxu0 0
    %2111 = vmatpush1.bf16.msra.mxu0 %v1607
    %2112 = vmatprep.subr.bf16.mxu0 0
    %2113 = vmatpush1.bf16.msra.mxu0 %v1608
    %2114 = vmatprep.subr.bf16.mxu0 0
    %2115 = vmatpush1.bf16.msra.mxu0 %v1609
    %2116 = vmatprep.subr.bf16.mxu0 0
    %2117 = vmatpush1.bf16.msra.mxu0 %v1610
    %2118 = vmatprep.subr.bf16.mxu0 0
    %2119 = vmatpush1.bf16.msra.mxu0 %v1611
    %2120 = vmatprep.subr.bf16.mxu0 0
    %2121 = vmatpush1.bf16.msra.mxu0 %v1612
    %2122 = vmatprep.subr.bf16.mxu0 0
    %2123 = vmatpush1.bf16.msra.mxu0 %v1613
    %2124 = vmatprep.subr.bf16.mxu0 0
    %2125 = vmatpush1.bf16.msra.mxu0 %v1614
    %2126 = vmatprep.subr.bf16.mxu0 0
    %2127 = vmatpush1.bf16.msra.mxu0 %v1615
    %2128 = vmatprep.subr.bf16.mxu0 0
    %2129 = vmatpush1.bf16.msra.mxu0 %v1616
    %2130 = vmatprep.subr.bf16.mxu0 0
    %2131 = vmatpush1.bf16.msra.mxu0 %v1617
    %2132 = vmatprep.subr.bf16.mxu0 0
    %2133 = vmatpush1.bf16.msra.mxu0 %v1618
    %2134 = vmatprep.mubr.bf16.mxu0 %v794
    %2135 = vmatmul.mubr.bf16.gmra.mrb[0].mxu0 %v793
    %v2136 = vpop.f32.mrb[0].mxu0
    %v2137 = vadd.f32 %v2040, %v2136
    %v2138 = vpop.f32.mrb[0].mxu0
    %v2139 = vpop.f32.mrb[0].mxu0
    %v2140 = vadd.f32 %v2043, %v2139
    %v2141 = vpop.f32.mrb[0].mxu0
    %2142 = vmatprep.mubr.bf16.mxu0 %v810
    %2143 = vmatmul.mubr.bf16.gmra.mrb[0].mxu0 %v809
    %v2144 = vpop.f32.mrb[0].mxu0
    %v2145 = vadd.f32 %v2048, %v2144
    %v2146 = vpop.f32.mrb[0].mxu0
    %v2147 = vpop.f32.mrb[0].mxu0
    %v2148 = vadd.f32 %v2051, %v2147
    %v2149 = vpop.f32.mrb[0].mxu0
    %2150 = vmatprep.mubr.bf16.mxu0 %v826
    %2151 = vmatmul.mubr.bf16.gmra.mrb[0].mxu0 %v825
    %v2152 = vpop.f32.mrb[0].mxu0
    %v2153 = vadd.f32 %v2056, %v2152
    %v2154 = vpop.f32.mrb[0].mxu0
    %v2155 = vpop.f32.mrb[0].mxu0
    %v2156 = vadd.f32 %v2059, %v2155
    %v2157 = vpop.f32.mrb[0].mxu0
    %2158 = vmatprep.mubr.bf16.mxu0 %v842
    %2159 = vmatmul.mubr.bf16.gmra.mrb[0].mxu0 %v841
    %v2160 = vpop.f32.mrb[0].mxu0
    %v2161 = vadd.f32 %v2064, %v2160
    %v2162 = vpop.f32.mrb[0].mxu0
    %v2163 = vpop.f32.mrb[0].mxu0
    %v2164 = vadd.f32 %v2067, %v2163
    %v2165 = vpop.f32.mrb[0].mxu0
    %2166 = vmatprep.mubr.bf16.mxu0 %v858
    %2167 = vmatmul.mubr.bf16.gmra.mrb[0].mxu0 %v857
    %v2168 = vpop.f32.mrb[0].mxu0
    %v2169 = vadd.f32 %v2072, %v2168
    %v2170 = vpop.f32.mrb[0].mxu0
    %v2171 = vpop.f32.mrb[0].mxu0
    %v2172 = vadd.f32 %v2075, %v2171
    %v2173 = vpop.f32.mrb[0].mxu0
    %2174 = vmatprep.mubr.bf16.mxu0 %v874
    %2175 = vmatmul.mubr.bf16.gmra.mrb[0].mxu0 %v873
    %v2176 = vpop.f32.mrb[0].mxu0
    %v2177 = vadd.f32 %v2080, %v2176
    %v2178 = vpop.f32.mrb[0].mxu0
    %v2179 = vpop.f32.mrb[0].mxu0
    %v2180 = vadd.f32 %v2083, %v2179
    %v2181 = vpop.f32.mrb[0].mxu0
    %2182 = vmatprep.mubr.bf16.mxu0 %v890
    %2183 = vmatmul.mubr.bf16.gmra.mrb[0].mxu0 %v889
    %v2184 = vpop.f32.mrb[0].mxu0
    %v2185 = vadd.f32 %v2088, %v2184
    %v2186 = vpop.f32.mrb[0].mxu0
    %v2187 = vpop.f32.mrb[0].mxu0
    %v2188 = vadd.f32 %v2091, %v2187
    %v2189 = vpop.f32.mrb[0].mxu0
    %2190 = vmatprep.mubr.bf16.mxu0 %v906
    %2191 = vmatmul.mubr.bf16.gmra.mrb[0].mxu0 %v905
    %v2192 = vpop.f32.mrb[0].mxu0
    %v2193 = vadd.f32 %v2096, %v2192
    %v2194 = vpop.f32.mrb[0].mxu0
    %v2195 = vpop.f32.mrb[0].mxu0
    %v2196 = vadd.f32 %v2099, %v2195
    %v2197 = vpop.f32.mrb[0].mxu0
    %2198 = vdwg.mxu0
    %2199 = vmatprep.subr.bf16.mxu0 0
    %2200 = vmatpush1.bf16.msra.mxu0 %v1619
    %2201 = vmatprep.subr.bf16.mxu0 0
    %2202 = vmatpush1.bf16.msra.mxu0 %v1620
    %2203 = vmatprep.subr.bf16.mxu0 0
    %2204 = vmatpush1.bf16.msra.mxu0 %v1621
    %2205 = vmatprep.subr.bf16.mxu0 0
    %2206 = vmatpush1.bf16.msra.mxu0 %v1622
    %2207 = vmatprep.subr.bf16.mxu0 0
    %2208 = vmatpush1.bf16.msra.mxu0 %v1623
    %2209 = vmatprep.subr.bf16.mxu0 0
    %2210 = vmatpush1.bf16.msra.mxu0 %v1624
    %2211 = vmatprep.subr.bf16.mxu0 0
    %2212 = vmatpush1.bf16.msra.mxu0 %v1625
    %2213 = vmatprep.subr.bf16.mxu0 0
    %2214 = vmatpush1.bf16.msra.mxu0 %v1626
    %2215 = vmatprep.subr.bf16.mxu0 0
    %2216 = vmatpush1.bf16.msra.mxu0 %v1627
    %2217 = vmatprep.subr.bf16.mxu0 0
    %2218 = vmatpush1.bf16.msra.mxu0 %v1628
    %2219 = vmatprep.subr.bf16.mxu0 0
    %2220 = vmatpush1.bf16.msra.mxu0 %v1629
    %2221 = vmatprep.subr.bf16.mxu0 0
    %2222 = vmatpush1.bf16.msra.mxu0 %v1630
    %2223 = vmatprep.subr.bf16.mxu0 0
    %2224 = vmatpush1.bf16.msra.mxu0 %v1631
    %2225 = vmatprep.subr.bf16.mxu0 0
    %2226 = vmatpush1.bf16.msra.mxu0 %v1632
    %2227 = vmatprep.subr.bf16.mxu0 0
    %2228 = vmatpush1.bf16.msra.mxu0 %v1633
    %2229 = vmatprep.subr.bf16.mxu0 0
    %2230 = vmatpush1.bf16.msra.mxu0 %v1634
    %2231 = vmatprep.mubr.bf16.mxu0 %v796
    %2232 = vmatmul.mubr.bf16.gmra.mrb[0].mxu0 %v795
    %v2233 = vpop.f32.mrb[0].mxu0
    %v2234 = vadd.f32 %v2137, %v2233
    %v2235 = vpop.f32.mrb[0].mxu0
    %v2236 = vpop.f32.mrb[0].mxu0
    %v2237 = vadd.f32 %v2140, %v2236
    %v2238 = vpop.f32.mrb[0].mxu0
    %2239 = vmatprep.mubr.bf16.mxu0 %v812
    %2240 = vmatmul.mubr.bf16.gmra.mrb[0].mxu0 %v811
    %v2241 = vpop.f32.mrb[0].mxu0
    %v2242 = vadd.f32 %v2145, %v2241
    %v2243 = vpop.f32.mrb[0].mxu0
    %v2244 = vpop.f32.mrb[0].mxu0
    %v2245 = vadd.f32 %v2148, %v2244
    %v2246 = vpop.f32.mrb[0].mxu0
    %2247 = vmatprep.mubr.bf16.mxu0 %v828
    %2248 = vmatmul.mubr.bf16.gmra.mrb[0].mxu0 %v827
    %v2249 = vpop.f32.mrb[0].mxu0
    %v2250 = vadd.f32 %v2153, %v2249
    %v2251 = vpop.f32.mrb[0].mxu0
    %v2252 = vpop.f32.mrb[0].mxu0
    %v2253 = vadd.f32 %v2156, %v2252
    %v2254 = vpop.f32.mrb[0].mxu0
    %2255 = vmatprep.mubr.bf16.mxu0 %v844
    %2256 = vmatmul.mubr.bf16.gmra.mrb[0].mxu0 %v843
    %v2257 = vpop.f32.mrb[0].mxu0
    %v2258 = vadd.f32 %v2161, %v2257
    %v2259 = vpop.f32.mrb[0].mxu0
    %v2260 = vpop.f32.mrb[0].mxu0
    %v2261 = vadd.f32 %v2164, %v2260
    %v2262 = vpop.f32.mrb[0].mxu0
    %2263 = vmatprep.mubr.bf16.mxu0 %v860
    %2264 = vmatmul.mubr.bf16.gmra.mrb[0].mxu0 %v859
    %v2265 = vpop.f32.mrb[0].mxu0
    %v2266 = vadd.f32 %v2169, %v2265
    %v2267 = vpop.f32.mrb[0].mxu0
    %v2268 = vpop.f32.mrb[0].mxu0
    %v2269 = vadd.f32 %v2172, %v2268
    %v2270 = vpop.f32.mrb[0].mxu0
    %2271 = vmatprep.mubr.bf16.mxu0 %v876
    %2272 = vmatmul.mubr.bf16.gmra.mrb[0].mxu0 %v875
    %v2273 = vpop.f32.mrb[0].mxu0
    %v2274 = vadd.f32 %v2177, %v2273
    %v2275 = vpop.f32.mrb[0].mxu0
    %v2276 = vpop.f32.mrb[0].mxu0
    %v2277 = vadd.f32 %v2180, %v2276
    %v2278 = vpop.f32.mrb[0].mxu0
    %2279 = vmatprep.mubr.bf16.mxu0 %v892
    %2280 = vmatmul.mubr.bf16.gmra.mrb[0].mxu0 %v891
    %v2281 = vpop.f32.mrb[0].mxu0
    %v2282 = vadd.f32 %v2185, %v2281
    %v2283 = vpop.f32.mrb[0].mxu0
    %v2284 = vpop.f32.mrb[0].mxu0
    %v2285 = vadd.f32 %v2188, %v2284
    %v2286 = vpop.f32.mrb[0].mxu0
    %2287 = vmatprep.mubr.bf16.mxu0 %v908
    %2288 = vmatmul.mubr.bf16.gmra.mrb[0].mxu0 %v907
    %v2289 = vpop.f32.mrb[0].mxu0
    %v2290 = vadd.f32 %v2193, %v2289
    %v2291 = vpop.f32.mrb[0].mxu0
    %v2292 = vpop.f32.mrb[0].mxu0
    %v2293 = vadd.f32 %v2196, %v2292
    %v2294 = vpop.f32.mrb[0].mxu0
    %2295 = vdwg.mxu0
    %2296 = vmatprep.subr.bf16.mxu0 0
    %2297 = vmatpush1.bf16.msra.mxu0 %v1635
    %2298 = vmatprep.subr.bf16.mxu0 0
    %2299 = vmatpush1.bf16.msra.mxu0 %v1636
    %2300 = vmatprep.subr.bf16.mxu0 0
    %2301 = vmatpush1.bf16.msra.mxu0 %v1637
    %2302 = vmatprep.subr.bf16.mxu0 0
    %2303 = vmatpush1.bf16.msra.mxu0 %v1638
    %2304 = vmatprep.subr.bf16.mxu0 0
    %2305 = vmatpush1.bf16.msra.mxu0 %v1639
    %2306 = vmatprep.subr.bf16.mxu0 0
    %2307 = vmatpush1.bf16.msra.mxu0 %v1640
    %2308 = vmatprep.subr.bf16.mxu0 0
    %2309 = vmatpush1.bf16.msra.mxu0 %v1641
    %2310 = vmatprep.subr.bf16.mxu0 0
    %2311 = vmatpush1.bf16.msra.mxu0 %v1642
    %2312 = vmatprep.subr.bf16.mxu0 0
    %2313 = vmatpush1.bf16.msra.mxu0 %v1643
    %2314 = vmatprep.subr.bf16.mxu0 0
    %2315 = vmatpush1.bf16.msra.mxu0 %v1644
    %2316 = vmatprep.subr.bf16.mxu0 0
    %2317 = vmatpush1.bf16.msra.mxu0 %v1645
    %2318 = vmatprep.subr.bf16.mxu0 0
    %2319 = vmatpush1.bf16.msra.mxu0 %v1646
    %2320 = vmatprep.subr.bf16.mxu0 0
    %2321 = vmatpush1.bf16.msra.mxu0 %v1647
    %2322 = vmatprep.subr.bf16.mxu0 0
    %2323 = vmatpush1.bf16.msra.mxu0 %v1648
    %2324 = vmatprep.subr.bf16.mxu0 0
    %2325 = vmatpush1.bf16.msra.mxu0 %v1649
    %2326 = vmatprep.subr.bf16.mxu0 0
    %2327 = vmatpush1.bf16.msra.mxu0 %v1650
    %2328 = vmatprep.mubr.bf16.mxu0 %v798
    %2329 = vmatmul.mubr.bf16.gmra.mrb[0].mxu0 %v797
    %v2330 = vpop.f32.mrb[0].mxu0
    %v2331 = vadd.f32 %v2234, %v2330
    %v2332 = vpop.f32.mrb[0].mxu0
    %v2333 = vpop.f32.mrb[0].mxu0
    %v2334 = vadd.f32 %v2237, %v2333
    %v2335 = vpop.f32.mrb[0].mxu0
    %2336 = vmatprep.mubr.bf16.mxu0 %v814
    %2337 = vmatmul.mubr.bf16.gmra.mrb[0].mxu0 %v813
    %v2338 = vpop.f32.mrb[0].mxu0
    %v2339 = vadd.f32 %v2242, %v2338
    %v2340 = vpop.f32.mrb[0].mxu0
    %v2341 = vpop.f32.mrb[0].mxu0
    %v2342 = vadd.f32 %v2245, %v2341
    %v2343 = vpop.f32.mrb[0].mxu0
    %2344 = vmatprep.mubr.bf16.mxu0 %v830
    %2345 = vmatmul.mubr.bf16.gmra.mrb[0].mxu0 %v829
    %v2346 = vpop.f32.mrb[0].mxu0
    %v2347 = vadd.f32 %v2250, %v2346
    %v2348 = vpop.f32.mrb[0].mxu0
    %v2349 = vpop.f32.mrb[0].mxu0
    %v2350 = vadd.f32 %v2253, %v2349
    %v2351 = vpop.f32.mrb[0].mxu0
    %2352 = vmatprep.mubr.bf16.mxu0 %v846
    %2353 = vmatmul.mubr.bf16.gmra.mrb[0].mxu0 %v845
    %v2354 = vpop.f32.mrb[0].mxu0
    %v2355 = vadd.f32 %v2258, %v2354
    %v2356 = vpop.f32.mrb[0].mxu0
    %v2357 = vpop.f32.mrb[0].mxu0
    %v2358 = vadd.f32 %v2261, %v2357
    %v2359 = vpop.f32.mrb[0].mxu0
    %2360 = vmatprep.mubr.bf16.mxu0 %v862
    %2361 = vmatmul.mubr.bf16.gmra.mrb[0].mxu0 %v861
    %v2362 = vpop.f32.mrb[0].mxu0
    %v2363 = vadd.f32 %v2266, %v2362
    %v2364 = vpop.f32.mrb[0].mxu0
    %v2365 = vpop.f32.mrb[0].mxu0
    %v2366 = vadd.f32 %v2269, %v2365
    %v2367 = vpop.f32.mrb[0].mxu0
    %2368 = vmatprep.mubr.bf16.mxu0 %v878
    %2369 = vmatmul.mubr.bf16.gmra.mrb[0].mxu0 %v877
    %v2370 = vpop.f32.mrb[0].mxu0
    %v2371 = vadd.f32 %v2274, %v2370
    %v2372 = vpop.f32.mrb[0].mxu0
    %v2373 = vpop.f32.mrb[0].mxu0
    %v2374 = vadd.f32 %v2277, %v2373
    %v2375 = vpop.f32.mrb[0].mxu0
    %2376 = vmatprep.mubr.bf16.mxu0 %v894
    %2377 = vmatmul.mubr.bf16.gmra.mrb[0].mxu0 %v893
    %v2378 = vpop.f32.mrb[0].mxu0
    %v2379 = vadd.f32 %v2282, %v2378
    %v2380 = vpop.f32.mrb[0].mxu0
    %v2381 = vpop.f32.mrb[0].mxu0
    %v2382 = vadd.f32 %v2285, %v2381
    %v2383 = vpop.f32.mrb[0].mxu0
    %2384 = vmatprep.mubr.bf16.mxu0 %v910
    %2385 = vmatmul.mubr.bf16.gmra.mrb[0].mxu0 %v909
    %v2386 = vpop.f32.mrb[0].mxu0
    %v2387 = vadd.f32 %v2290, %v2386
    %v2388 = vpop.f32.mrb[0].mxu0
    %v2389 = vpop.f32.mrb[0].mxu0
    %v2390 = vadd.f32 %v2293, %v2389
    %v2391 = vpop.f32.mrb[0].mxu0
    %2392 = vdwg.mxu0
    %2393 = vmatprep.subr.bf16.mxu0 0
    %2394 = vmatpush1.bf16.msra.mxu0 %v1651
    %2395 = vmatprep.subr.bf16.mxu0 0
    %2396 = vmatpush1.bf16.msra.mxu0 %v1652
    %2397 = vmatprep.subr.bf16.mxu0 0
    %2398 = vmatpush1.bf16.msra.mxu0 %v1653
    %2399 = vmatprep.subr.bf16.mxu0 0
    %2400 = vmatpush1.bf16.msra.mxu0 %v1654
    %2401 = vmatprep.subr.bf16.mxu0 0
    %2402 = vmatpush1.bf16.msra.mxu0 %v1655
    %2403 = vmatprep.subr.bf16.mxu0 0
    %2404 = vmatpush1.bf16.msra.mxu0 %v1656
    %2405 = vmatprep.subr.bf16.mxu0 0
    %2406 = vmatpush1.bf16.msra.mxu0 %v1657
    %2407 = vmatprep.subr.bf16.mxu0 0
    %2408 = vmatpush1.bf16.msra.mxu0 %v1658
    %2409 = vmatprep.subr.bf16.mxu0 0
    %2410 = vmatpush1.bf16.msra.mxu0 %v1659
    %2411 = vmatprep.subr.bf16.mxu0 0
    %2412 = vmatpush1.bf16.msra.mxu0 %v1660
    %2413 = vmatprep.subr.bf16.mxu0 0
    %2414 = vmatpush1.bf16.msra.mxu0 %v1661
    %2415 = vmatprep.subr.bf16.mxu0 0
    %2416 = vmatpush1.bf16.msra.mxu0 %v1662
    %2417 = vmatprep.subr.bf16.mxu0 0
    %2418 = vmatpush1.bf16.msra.mxu0 %v1663
    %2419 = vmatprep.subr.bf16.mxu0 0
    %2420 = vmatpush1.bf16.msra.mxu0 %v1664
    %2421 = vmatprep.subr.bf16.mxu0 0
    %2422 = vmatpush1.bf16.msra.mxu0 %v1665
    %2423 = vmatprep.subr.bf16.mxu0 0
    %2424 = vmatpush1.bf16.msra.mxu0 %v1666
    %2425 = vmatprep.mubr.bf16.mxu0 %v800
    %2426 = vmatmul.mubr.bf16.gmra.mrb[0].mxu0 %v799
    %v2427 = vpop.f32.mrb[0].mxu0
    %v2428 = vadd.f32 %v2331, %v2427
    %v2429 = vpop.f32.mrb[0].mxu0
    %v2430 = vpop.f32.mrb[0].mxu0
    %v2431 = vadd.f32 %v2334, %v2430
    %v2432 = vpop.f32.mrb[0].mxu0
    %2433 = vmatprep.mubr.bf16.mxu0 %v816
    %2434 = vmatmul.mubr.bf16.gmra.mrb[0].mxu0 %v815
    %v2435 = vpop.f32.mrb[0].mxu0
    %v2436 = vadd.f32 %v2339, %v2435
    %v2437 = vpop.f32.mrb[0].mxu0
    %v2438 = vpop.f32.mrb[0].mxu0
    %v2439 = vadd.f32 %v2342, %v2438
    %v2440 = vpop.f32.mrb[0].mxu0
    %2441 = vmatprep.mubr.bf16.mxu0 %v832
    %2442 = vmatmul.mubr.bf16.gmra.mrb[0].mxu0 %v831
    %v2443 = vpop.f32.mrb[0].mxu0
    %v2444 = vadd.f32 %v2347, %v2443
    %v2445 = vpop.f32.mrb[0].mxu0
    %v2446 = vpop.f32.mrb[0].mxu0
    %v2447 = vadd.f32 %v2350, %v2446
    %v2448 = vpop.f32.mrb[0].mxu0
    %2449 = vmatprep.mubr.bf16.mxu0 %v848
    %2450 = vmatmul.mubr.bf16.gmra.mrb[0].mxu0 %v847
    %v2451 = vpop.f32.mrb[0].mxu0
    %v2452 = vadd.f32 %v2355, %v2451
    %v2453 = vpop.f32.mrb[0].mxu0
    %v2454 = vpop.f32.mrb[0].mxu0
    %v2455 = vadd.f32 %v2358, %v2454
    %v2456 = vpop.f32.mrb[0].mxu0
    %2457 = vmatprep.mubr.bf16.mxu0 %v864
    %2458 = vmatmul.mubr.bf16.gmra.mrb[0].mxu0 %v863
    %v2459 = vpop.f32.mrb[0].mxu0
    %v2460 = vadd.f32 %v2363, %v2459
    %v2461 = vpop.f32.mrb[0].mxu0
    %v2462 = vpop.f32.mrb[0].mxu0
    %v2463 = vadd.f32 %v2366, %v2462
    %v2464 = vpop.f32.mrb[0].mxu0
    %2465 = vmatprep.mubr.bf16.mxu0 %v880
    %2466 = vmatmul.mubr.bf16.gmra.mrb[0].mxu0 %v879
    %v2467 = vpop.f32.mrb[0].mxu0
    %v2468 = vadd.f32 %v2371, %v2467
    %v2469 = vpop.f32.mrb[0].mxu0
    %v2470 = vpop.f32.mrb[0].mxu0
    %v2471 = vadd.f32 %v2374, %v2470
    %v2472 = vpop.f32.mrb[0].mxu0
    %2473 = vmatprep.mubr.bf16.mxu0 %v896
    %2474 = vmatmul.mubr.bf16.gmra.mrb[0].mxu0 %v895
    %v2475 = vpop.f32.mrb[0].mxu0
    %v2476 = vadd.f32 %v2379, %v2475
    %v2477 = vpop.f32.mrb[0].mxu0
    %v2478 = vpop.f32.mrb[0].mxu0
    %v2479 = vadd.f32 %v2382, %v2478
    %v2480 = vpop.f32.mrb[0].mxu0
    %2481 = vmatprep.mubr.bf16.mxu0 %v912
    %2482 = vmatmul.mubr.bf16.gmra.mrb[0].mxu0 %v911
    %v2483 = vpop.f32.mrb[0].mxu0
    %v2484 = vadd.f32 %v2387, %v2483
    %v2485 = vpop.f32.mrb[0].mxu0
    %v2486 = vpop.f32.mrb[0].mxu0
    %v2487 = vadd.f32 %v2390, %v2486
    %v2488 = vpop.f32.mrb[0].mxu0
    %2489 = vdwg.mxu0
    %2490 = vmatprep.subr.bf16.mxu0 0
    %2491 = vmatpush1.bf16.msra.mxu0 %v1667
    %2492 = vmatprep.subr.bf16.mxu0 0
    %2493 = vmatpush1.bf16.msra.mxu0 %v1668
    %2494 = vmatprep.subr.bf16.mxu0 0
    %2495 = vmatpush1.bf16.msra.mxu0 %v1669
    %2496 = vmatprep.subr.bf16.mxu0 0
    %2497 = vmatpush1.bf16.msra.mxu0 %v1670
    %2498 = vmatprep.subr.bf16.mxu0 0
    %2499 = vmatpush1.bf16.msra.mxu0 %v1671
    %2500 = vmatprep.subr.bf16.mxu0 0
    %2501 = vmatpush1.bf16.msra.mxu0 %v1672
    %2502 = vmatprep.subr.bf16.mxu0 0
    %2503 = vmatpush1.bf16.msra.mxu0 %v1673
    %2504 = vmatprep.subr.bf16.mxu0 0
    %2505 = vmatpush1.bf16.msra.mxu0 %v1674
    %2506 = vmatprep.subr.bf16.mxu0 0
    %2507 = vmatpush1.bf16.msra.mxu0 %v1675
    %2508 = vmatprep.subr.bf16.mxu0 0
    %2509 = vmatpush1.bf16.msra.mxu0 %v1676
    %2510 = vmatprep.subr.bf16.mxu0 0
    %2511 = vmatpush1.bf16.msra.mxu0 %v1677
    %2512 = vmatprep.subr.bf16.mxu0 0
    %2513 = vmatpush1.bf16.msra.mxu0 %v1678
    %2514 = vmatprep.subr.bf16.mxu0 0
    %2515 = vmatpush1.bf16.msra.mxu0 %v1679
    %2516 = vmatprep.subr.bf16.mxu0 0
    %2517 = vmatpush1.bf16.msra.mxu0 %v1680
    %2518 = vmatprep.subr.bf16.mxu0 0
    %2519 = vmatpush1.bf16.msra.mxu0 %v1681
    %2520 = vmatprep.subr.bf16.mxu0 0
    %2521 = vmatpush1.bf16.msra.mxu0 %v1682
    %2522 = vmatprep.mubr.bf16.mxu0 %v802
    %2523 = vmatmul.mubr.bf16.gmra.mrb[0].mxu0 %v801
    %v2524 = vpop.f32.mrb[0].mxu0
    %v2525 = vadd.f32 %v2428, %v2524
    %v2526 = vpop.f32.mrb[0].mxu0
    %v2527 = vpop.f32.mrb[0].mxu0
    %v2528 = vadd.f32 %v2431, %v2527
    %v2529 = vpop.f32.mrb[0].mxu0
    %2530 = vmatprep.mubr.bf16.mxu0 %v818
    %2531 = vmatmul.mubr.bf16.gmra.mrb[0].mxu0 %v817
    %v2532 = vpop.f32.mrb[0].mxu0
    %v2533 = vadd.f32 %v2436, %v2532
    %v2534 = vpop.f32.mrb[0].mxu0
    %v2535 = vpop.f32.mrb[0].mxu0
    %v2536 = vadd.f32 %v2439, %v2535
    %v2537 = vpop.f32.mrb[0].mxu0
    %2538 = vmatprep.mubr.bf16.mxu0 %v834
    %2539 = vmatmul.mubr.bf16.gmra.mrb[0].mxu0 %v833
    %v2540 = vpop.f32.mrb[0].mxu0
    %v2541 = vadd.f32 %v2444, %v2540
    %v2542 = vpop.f32.mrb[0].mxu0
    %v2543 = vpop.f32.mrb[0].mxu0
    %v2544 = vadd.f32 %v2447, %v2543
    %v2545 = vpop.f32.mrb[0].mxu0
    %2546 = vmatprep.mubr.bf16.mxu0 %v850
    %2547 = vmatmul.mubr.bf16.gmra.mrb[0].mxu0 %v849
    %v2548 = vpop.f32.mrb[0].mxu0
    %v2549 = vadd.f32 %v2452, %v2548
    %v2550 = vpop.f32.mrb[0].mxu0
    %v2551 = vpop.f32.mrb[0].mxu0
    %v2552 = vadd.f32 %v2455, %v2551
    %v2553 = vpop.f32.mrb[0].mxu0
    %2554 = vmatprep.mubr.bf16.mxu0 %v866
    %2555 = vmatmul.mubr.bf16.gmra.mrb[0].mxu0 %v865
    %v2556 = vpop.f32.mrb[0].mxu0
    %v2557 = vadd.f32 %v2460, %v2556
    %v2558 = vpop.f32.mrb[0].mxu0
    %v2559 = vpop.f32.mrb[0].mxu0
    %v2560 = vadd.f32 %v2463, %v2559
    %v2561 = vpop.f32.mrb[0].mxu0
    %2562 = vmatprep.mubr.bf16.mxu0 %v882
    %2563 = vmatmul.mubr.bf16.gmra.mrb[0].mxu0 %v881
    %v2564 = vpop.f32.mrb[0].mxu0
    %v2565 = vadd.f32 %v2468, %v2564
    %v2566 = vpop.f32.mrb[0].mxu0
    %v2567 = vpop.f32.mrb[0].mxu0
    %v2568 = vadd.f32 %v2471, %v2567
    %v2569 = vpop.f32.mrb[0].mxu0
    %2570 = vmatprep.mubr.bf16.mxu0 %v898
    %2571 = vmatmul.mubr.bf16.gmra.mrb[0].mxu0 %v897
    %v2572 = vpop.f32.mrb[0].mxu0
    %v2573 = vadd.f32 %v2476, %v2572
    %v2574 = vpop.f32.mrb[0].mxu0
    %v2575 = vpop.f32.mrb[0].mxu0
    %v2576 = vadd.f32 %v2479, %v2575
    %v2577 = vpop.f32.mrb[0].mxu0
    %2578 = vmatprep.mubr.bf16.mxu0 %v914
    %2579 = vmatmul.mubr.bf16.gmra.mrb[0].mxu0 %v913
    %v2580 = vpop.f32.mrb[0].mxu0
    %v2581 = vadd.f32 %v2484, %v2580
    %v2582 = vpop.f32.mrb[0].mxu0
    %v2583 = vpop.f32.mrb[0].mxu0
    %v2584 = vadd.f32 %v2487, %v2583
    %v2585 = vpop.f32.mrb[0].mxu0
    %2586 = vdwg.mxu0
    %vm2587 = vcmask 261120
    %v2588 = vsel %vm2587, %v2525, 0.0
    %v2589 = vsel %vm2587, %v2528, 0.0
    %v2590 = vadd.f32 %v2588, %v2589
    %v2591 = vsel %vm2587, %v2533, 0.0
    %v2592 = vadd.f32 %v2590, %v2591
    %v2593 = vsel %vm2587, %v2536, 0.0
    %v2594 = vadd.f32 %v2592, %v2593
    %v2595 = vsel %vm2587, %v2541, 0.0
    %v2596 = vadd.f32 %v2594, %v2595
    %v2597 = vsel %vm2587, %v2544, 0.0
    %v2598 = vadd.f32 %v2596, %v2597
    %v2599 = vsel %vm2587, %v2549, 0.0
    %v2600 = vadd.f32 %v2598, %v2599
    %v2601 = vsel %vm2587, %v2552, 0.0
    %v2602 = vadd.f32 %v2600, %v2601
    %v2603 = vrot.slane %v2602, 4
    %v2604 = vadd.f32 %v2602, %v2603
    %v2605 = vrot.slane %v2604, 2
    %v2606 = vadd.f32 %v2604, %v2605
    %v2607 = vrot.slane %v2606, 1
    %v2608 = vadd.f32 %v2606, %v2607
    %v2609 = vsel %vm2587, %v2557, 0.0
    %v2610 = vsel %vm2587, %v2560, 0.0
    %v2611 = vadd.f32 %v2609, %v2610
    %v2612 = vsel %vm2587, %v2565, 0.0
    %v2613 = vadd.f32 %v2611, %v2612
    %v2614 = vsel %vm2587, %v2568, 0.0
    %v2615 = vadd.f32 %v2613, %v2614
    %v2616 = vsel %vm2587, %v2573, 0.0
    %v2617 = vadd.f32 %v2615, %v2616
    %v2618 = vsel %vm2587, %v2576, 0.0
    %v2619 = vadd.f32 %v2617, %v2618
    %v2620 = vsel %vm2587, %v2581, 0.0
    %v2621 = vadd.f32 %v2619, %v2620
    %v2622 = vsel %vm2587, %v2584, 0.0
    %v2623 = vadd.f32 %v2621, %v2622
    %v2624 = vrot.slane %v2623, 4
    %v2625 = vadd.f32 %v2623, %v2624
    %v2626 = vrot.slane %v2625, 2
    %v2627 = vadd.f32 %v2625, %v2626
    %v2628 = vrot.slane %v2627, 1
    %v2629 = vadd.f32 %v2627, %v2628
    %v2630 = vld [vmem:[%s2] sm:$0x1]
    %v2632 = vlaneseq
    %v2633 = vshrl.u32 %v2632, 7
    %v2634 = vsub.s32 0, %v2633
    %v2635 = vrot.slane %v2630, %v2634
    %v2637 = vadd.f32 %v2608, %v2635
    %v2638 = vadd.f32 %v2629, %v2635
    %v2639 = vmax.f32 %v2637, 0.0
    %v2640 = vmax.f32 %v2638, 0.0
    %v2641 = vld [vmem:[%s3] sm:$0x3]
    %vm2642 = vcmp.lt.u32.totalorder %v2641, 2147483648
    %v2643 = vmul.f32 %v2639, 2.0
    %v2644 = vmul.f32 %v2640, 2.0
    %v2647 = vrot.slane %v2644, 7
    %vm2648 = vcmask 1041409
    %v2649 = vsel %vm2648, %v2647, %v2643
    %v2651 = vsel %vm2642, %v2649, 0.0
    %vm2652 = vcmask 254976
    %2653 = vst.msk [vmem:[#allocation2] sm:$0x3] %vm2652, %v2651
    // Predicated region
    $region18: #{tpu_custom_call.1} parent=1 // pred_check
      _
    $region19: #{tpu_custom_call.1} parent=1 // pred_check_branch
      %2655 = sbr.rel (0) target = $region21
    $region20: #{tpu_custom_call.1} parent=1 // pred_region
      %s2657 = ssub.s32 32, 32
      %2658 = vsyncadd [#allocation3], %s2657
      %s2660 = sshll.u32 [#allocation2], 4
      %s2661 = int_to_ptr.vmem [resolvable:$true] %s2660
      %2663 = dma.vmem_to_hbm [thread:$0]  %s2661, 32, %s4, [#allocation3]
    $region21: #{tpu_custom_call.1} parent=1 // pred_fallthru
      _
    // Predicated region
    $region22: #{tpu_custom_call.1} parent=1 // pred_check
      _
    $region23: #{tpu_custom_call.1} parent=1 // pred_check_branch
      %2665 = sbr.rel (0) target = $region25
    $region24: #{tpu_custom_call.1} parent=1 // pred_region
      %2666 = dma.done [#allocation3], 32
    $region25: #{tpu_custom_call.1} parent=1 // pred_fallthru
      _
    %2667 = vsyncpa [#allocation3], 1

</llo_original>
